<compile_context>
chip_gen: v5e
topology: v5e:2x2
jax: 0.10.0
libtpu: 0.0.40
codegen_flags: <defaults>
</compile_context>

<pallas_src>
import jax
import jax.numpy as jnp
from jax.experimental import pallas as pl
from jax.experimental.pallas import tpu as pltpu

B = 8          # batch
S = 16         # sequence length
H = 768        # BERT hidden size
H1, H2, C = 384, 128, 2
VOCAB = 1000


def model_kernel(h_ref, wp_ref, bp_ref,
                 w1_ref, b1_ref, w2_ref, b2_ref, w3_ref, b3_ref,
                 labels_ref,
                 logits_ref, loss_ref):
    # --- BERT pooler: tanh(h @ Wp + bp).  bf16 feeds the MXU, f32 accumulate/epilogue. ---
    pooled = jnp.tanh(
        jnp.dot(h_ref[...], wp_ref[...], preferred_element_type=jnp.float32)
        + bp_ref[...])                                                    # (B, H) f32

    # --- Classifier MLP (Dropout(0.1) == identity in eval mode). ---
    a1 = jnp.tanh(
        jnp.dot(pooled.astype(jnp.bfloat16), w1_ref[...],
                preferred_element_type=jnp.float32) + b1_ref[...])        # (B, H1)
    a2 = jnp.tanh(
        jnp.dot(a1.astype(jnp.bfloat16), w2_ref[...],
                preferred_element_type=jnp.float32) + b2_ref[...])        # (B, H2)
    logits = jnp.dot(a2, w3_ref[...],
                     preferred_element_type=jnp.float32) + b3_ref[...]    # (B, C)
    logits_ref[...] = logits

    # --- CrossEntropyLoss (mean reduction), fused in-kernel, f32 throughout. ---
    m = jnp.max(logits, axis=-1, keepdims=True)                           # (B, 1)
    lse = m + jnp.log(jnp.sum(jnp.exp(logits - m), axis=-1, keepdims=True))
    cls_ids = jax.lax.broadcasted_iota(jnp.int32, logits.shape, 1)        # (B, C)
    onehot = (cls_ids == labels_ref[...]).astype(jnp.float32)             # labels: (B, 1)
    picked = jnp.sum(logits * onehot, axis=-1, keepdims=True)             # (B, 1)
    loss_ref[0, 0] = jnp.sum(lse - picked) * (1.0 / B)                    # scalar -> SMEM


def run_model(h_bf16, wp_b, bp, w1_b, b1, w2_b, b2, w3, b3, labels):
    """h_bf16: (B, H) bf16 sequence summary; big weights pre-cast to bf16, (in, out)."""
    labels2d = labels.reshape(B, 1).astype(jnp.int32)

    vmem = pl.BlockSpec(memory_space=pltpu.MemorySpace.VMEM)
    smem = pl.BlockSpec(memory_space=pltpu.MemorySpace.SMEM)

    logits, loss = pl.pallas_call(
        model_kernel,
        out_shape=(jax.ShapeDtypeStruct((B, C), jnp.float32),   # logits
                   jax.ShapeDtypeStruct((1, 1), jnp.float32)),  # loss (scalar)
        in_specs=[vmem] * 10,
        out_specs=(vmem, smem),
        compiler_params=pltpu.CompilerParams(vmem_limit_bytes=16 << 20),
        cost_estimate=pl.CostEstimate(
            flops=15_000_000, transcendentals=11_000, bytes_accessed=2_000_000),
    )(h_bf16, wp_b, bp.reshape(1, H),
      w1_b, b1.reshape(1, H1),
      w2_b, b2.reshape(1, H2),
      w3, b3.reshape(1, C),
      labels2d)
    return {"loss": loss[0, 0], "logits": logits}


@jax.jit
def forward(word_table, type_table, wp_b, bp, w1_b, b1, w2_b, b2, w3, b3,
            input_ids, attention_mask, token_type_ids, labels):
    # Glue fused with the kernel under one jit (stand-in for the BERT encoder output).
    # TODO(synk): could fold this gather + masked mean into the kernel via scalar
    # prefetch + manual DMA, but the pretrained encoder it replaces is already a stand-in.
    emb = word_table[input_ids] + type_table[token_type_ids]               # (B, S, H)
    mask = attention_mask[..., None].astype(jnp.float32)
    h = (emb * mask).sum(axis=1) / jnp.maximum(mask.sum(axis=1), 1.0)      # (B, H) f32
    out = run_model(h.astype(jnp.bfloat16), wp_b, bp, w1_b, b1,
                    w2_b, b2, w3, b3, labels)
    return out, h


def _linear_init(key, fan_in, fan_out):
    # PyTorch nn.Linear default: U(-1/sqrt(fan_in), 1/sqrt(fan_in)); stored here as (in, out).
    kw, kb = jax.random.split(key)
    bound = 1.0 / (fan_in ** 0.5)
    w = jax.random.uniform(kw, (fan_in, fan_out), jnp.float32, -bound, bound)
    b = jax.random.uniform(kb, (fan_out,), jnp.float32, -bound, bound)
    return w, b


if __name__ == "__main__":
    root = jax.random.PRNGKey(0)
    keys = jax.random.split(root, 10)

    # ---- deterministic "BERT" stand-in parameters ----
    word_table = jax.random.normal(keys[0], (VOCAB, H), jnp.float32) * 0.02
    type_table = jax.random.normal(keys[1], (2, H), jnp.float32) * 0.02
    wp, bp = _linear_init(keys[2], H, H)            # BERT pooler dense
    w1, b1 = _linear_init(keys[3], H, H1)           # Classifier.dense1
    w2, b2 = _linear_init(keys[4], H1, H2)          # Classifier.dense2
    w3, b3 = _linear_init(keys[5], H2, C)           # Classifier.dense3

    # Pre-cast big weights to bf16 ONCE (not per call) — kernel streams these directly.
    wp_b = wp.astype(jnp.bfloat16)
    w1_b = w1.astype(jnp.bfloat16)
    w2_b = w2.astype(jnp.bfloat16)

    # ---- deterministic example inputs ----
    input_ids = jax.random.randint(keys[6], (B, S), 0, VOCAB, jnp.int32)
    attention_mask = jnp.ones((B, S), jnp.int32)
    token_type_ids = jnp.zeros((B, S), jnp.int32)
    labels = jax.random.randint(keys[7], (B,), 0, C, jnp.int32)

    out, h = forward(word_table, type_table, wp_b, bp, w1_b, b1, w2_b, b2, w3, b3,
                     input_ids, attention_mask, token_type_ids, labels)
    out = jax.block_until_ready(out)

    # ---- pure-JAX reference check (mirrors the kernel's bf16 matmul quantization) ----
    def q(x):
        return x.astype(jnp.bfloat16).astype(jnp.float32)

    pooled_ref = jnp.tanh(q(h) @ q(wp) + bp)
    a1r = jnp.tanh(q(pooled_ref) @ q(w1) + b1)
    a2r = jnp.tanh(q(a1r) @ q(w2) + b2)
    logits_ref = a2r @ w3 + b3
    logz = jax.nn.logsumexp(logits_ref, axis=-1)
    loss_ref = jnp.mean(logz - jnp.take_along_axis(
        logits_ref, labels[:, None], axis=-1)[:, 0])

    assert jnp.allclose(out["logits"], logits_ref, atol=2e-3, rtol=2e-3)
    assert jnp.allclose(out["loss"], loss_ref, atol=2e-3, rtol=2e-3)

    print("KERNEL_OK")
</pallas_src>

<mosaic_0001>
module attributes {stable_mosaic.version = 11 : i64} {
  func.func @model_kernel(%arg0: memref<8x768xbf16, #tpu.memory_space<vmem>>, %arg1: memref<768x768xbf16, #tpu.memory_space<vmem>>, %arg2: memref<1x768xf32, #tpu.memory_space<vmem>>, %arg3: memref<768x384xbf16, #tpu.memory_space<vmem>>, %arg4: memref<1x384xf32, #tpu.memory_space<vmem>>, %arg5: memref<384x128xbf16, #tpu.memory_space<vmem>>, %arg6: memref<1x128xf32, #tpu.memory_space<vmem>>, %arg7: memref<128x2xf32, #tpu.memory_space<vmem>>, %arg8: memref<1x2xf32, #tpu.memory_space<vmem>>, %arg9: memref<8x1xi32, #tpu.memory_space<vmem>>, %arg10: memref<8x2xf32, #tpu.memory_space<vmem>>, %arg11: memref<1x1xf32, #tpu.memory_space<smem>>) attributes {dimension_semantics = [], scalar_prefetch = 0 : i64, scratch_operands = 0 : i64, tpu.core_type = #tpu.core_type<tc>} {
    %c0 = arith.constant 0 : index
    %c0_0 = arith.constant 0 : index
    %0 = vector.load %arg0[%c0, %c0_0] : memref<8x768xbf16, #tpu.memory_space<vmem>>, vector<8x768xbf16>
    %c0_1 = arith.constant 0 : index
    %c0_2 = arith.constant 0 : index
    %1 = vector.load %arg1[%c0_1, %c0_2] : memref<768x768xbf16, #tpu.memory_space<vmem>>, vector<768x768xbf16>
    %cst = arith.constant dense<0.000000e+00> : vector<8x768xf32>
    %2 = tpu.matmul %0, %1, %cst {dimension_numbers = #tpu.dot_dimension_numbers<[1], [0], [0], [1], [0, 0, 1, 1], [], []>} : vector<8x768xbf16>, vector<768x768xbf16>, vector<8x768xf32> -> vector<8x768xf32>
    %c0_3 = arith.constant 0 : index
    %c0_4 = arith.constant 0 : index
    %3 = vector.load %arg2[%c0_3, %c0_4] : memref<1x768xf32, #tpu.memory_space<vmem>>, vector<1x768xf32>
    %4 = vector.broadcast %3 : vector<1x768xf32> to vector<8x768xf32>
    %5 = arith.addf %2, %4 : vector<8x768xf32>
    %6 = math.tanh %5 : vector<8x768xf32>
    %7 = arith.truncf %6 : vector<8x768xf32> to vector<8x768xbf16>
    %c0_5 = arith.constant 0 : index
    %c0_6 = arith.constant 0 : index
    %8 = vector.load %arg3[%c0_5, %c0_6] : memref<768x384xbf16, #tpu.memory_space<vmem>>, vector<768x384xbf16>
    %cst_7 = arith.constant dense<0.000000e+00> : vector<8x384xf32>
    %9 = tpu.matmul %7, %8, %cst_7 {dimension_numbers = #tpu.dot_dimension_numbers<[1], [0], [0], [1], [0, 0, 1, 1], [], []>} : vector<8x768xbf16>, vector<768x384xbf16>, vector<8x384xf32> -> vector<8x384xf32>
    %c0_8 = arith.constant 0 : index
    %c0_9 = arith.constant 0 : index
    %10 = vector.load %arg4[%c0_8, %c0_9] : memref<1x384xf32, #tpu.memory_space<vmem>>, vector<1x384xf32>
    %11 = vector.broadcast %10 : vector<1x384xf32> to vector<8x384xf32>
    %12 = arith.addf %9, %11 : vector<8x384xf32>
    %13 = math.tanh %12 : vector<8x384xf32>
    %14 = arith.truncf %13 : vector<8x384xf32> to vector<8x384xbf16>
    %c0_10 = arith.constant 0 : index
    %c0_11 = arith.constant 0 : index
    %15 = vector.load %arg5[%c0_10, %c0_11] : memref<384x128xbf16, #tpu.memory_space<vmem>>, vector<384x128xbf16>
    %cst_12 = arith.constant dense<0.000000e+00> : vector<8x128xf32>
    %16 = tpu.matmul %14, %15, %cst_12 {dimension_numbers = #tpu.dot_dimension_numbers<[1], [0], [0], [1], [0, 0, 1, 1], [], []>} : vector<8x384xbf16>, vector<384x128xbf16>, vector<8x128xf32> -> vector<8x128xf32>
    %c0_13 = arith.constant 0 : index
    %c0_14 = arith.constant 0 : index
    %17 = vector.load %arg6[%c0_13, %c0_14] : memref<1x128xf32, #tpu.memory_space<vmem>>, vector<1x128xf32>
    %18 = vector.broadcast %17 : vector<1x128xf32> to vector<8x128xf32>
    %19 = arith.addf %16, %18 : vector<8x128xf32>
    %20 = math.tanh %19 : vector<8x128xf32>
    %c0_15 = arith.constant 0 : index
    %c0_16 = arith.constant 0 : index
    %21 = vector.load %arg7[%c0_15, %c0_16] : memref<128x2xf32, #tpu.memory_space<vmem>>, vector<128x2xf32>
    %cst_17 = arith.constant dense<0.000000e+00> : vector<8x2xf32>
    %22 = tpu.matmul %20, %21, %cst_17 {dimension_numbers = #tpu.dot_dimension_numbers<[1], [0], [0], [1], [0, 0, 1, 1], [], []>} : vector<8x128xf32>, vector<128x2xf32>, vector<8x2xf32> -> vector<8x2xf32>
    %c0_18 = arith.constant 0 : index
    %c0_19 = arith.constant 0 : index
    %23 = vector.load %arg8[%c0_18, %c0_19] : memref<1x2xf32, #tpu.memory_space<vmem>>, vector<1x2xf32>
    %24 = vector.broadcast %23 : vector<1x2xf32> to vector<8x2xf32>
    %25 = arith.addf %22, %24 : vector<8x2xf32>
    %c0_20 = arith.constant 0 : index
    %c0_21 = arith.constant 0 : index
    %26 = vector.load %arg10[%c0_20, %c0_21] : memref<8x2xf32, #tpu.memory_space<vmem>>, vector<8x2xf32>
    tpu.vector_store %arg10[%c0_20, %c0_21], %25 {strides = array<i32>} : memref<8x2xf32, #tpu.memory_space<vmem>>, vector<8x2xf32>,
    %cst_22 = arith.constant dense<0xFF800000> : vector<8xf32>
    %27 = vector.multi_reduction <maximumf>, %25, %cst_22 [1] : vector<8x2xf32> to vector<8xf32>
    %28 = vector.shape_cast %27 : vector<8xf32> to vector<8x1xf32>
    %29 = vector.broadcast %28 : vector<8x1xf32> to vector<8x2xf32>
    %30 = arith.subf %25, %29 : vector<8x2xf32>
    %31 = math.exp %30 : vector<8x2xf32>
    %cst_23 = arith.constant dense<0.000000e+00> : vector<8xf32>
    %32 = vector.multi_reduction <add>, %31, %cst_23 [1] : vector<8x2xf32> to vector<8xf32>
    %33 = vector.shape_cast %32 : vector<8xf32> to vector<8x1xf32>
    %34 = math.log %33 : vector<8x1xf32>
    %35 = arith.addf %28, %34 : vector<8x1xf32>
    %36 = tpu.iota {dimensions = array<i32: 1>} : vector<8x2xi32>
    %c0_24 = arith.constant 0 : index
    %c0_25 = arith.constant 0 : index
    %37 = vector.load %arg9[%c0_24, %c0_25] : memref<8x1xi32, #tpu.memory_space<vmem>>, vector<8x1xi32>
    %38 = vector.broadcast %37 : vector<8x1xi32> to vector<8x2xi32>
    %39 = arith.cmpi eq, %36, %38 : vector<8x2xi32>
    %40 = arith.extui %39 : vector<8x2xi1> to vector<8x2xi32>
    %41 = arith.sitofp %40 : vector<8x2xi32> to vector<8x2xf32>
    %42 = arith.mulf %25, %41 : vector<8x2xf32>
    %cst_26 = arith.constant dense<0.000000e+00> : vector<8xf32>
    %43 = vector.multi_reduction <add>, %42, %cst_26 [1] : vector<8x2xf32> to vector<8xf32>
    %44 = vector.shape_cast %43 : vector<8xf32> to vector<8x1xf32>
    %45 = arith.subf %35, %44 : vector<8x1xf32>
    %46 = vector.shape_cast %45 : vector<8x1xf32> to vector<1x8x1xf32>
    %cst_27 = arith.constant dense<0.000000e+00> : vector<1xf32>
    %47 = vector.multi_reduction <add>, %46, %cst_27 [1, 2] : vector<1x8x1xf32> to vector<1xf32>
    %48 = vector.shape_cast %47 : vector<1xf32> to vector<1x1x1xf32>
    %49 = vector.extract %48[0, 0, 0] : f32 from vector<1x1x1xf32>
    %cst_28 = arith.constant 1.250000e-01 : f32
    %50 = arith.mulf %49, %cst_28 : f32
    %c0_29 = arith.constant 0 : index
    %c0_30 = arith.constant 0 : index
    %51 = memref.load %arg11[%c0_29, %c0_30] : memref<1x1xf32, #tpu.memory_space<smem>>
    memref.store %50, %arg11[%c0_29, %c0_30] : memref<1x1xf32, #tpu.memory_space<smem>>
    return
  }
}

</mosaic_0001>

<llo_original>
// kernel: forward.1
$region0: #{forward.1}
  #allocation0 [shape = 'u32[]', space=smem, size = 0x4, offset = 0x4, fixed_abs, tag = 'smem constant byte address 0x4 - core index']
  #allocation1 [shape = 'u32[72,128]{1,0:T(1,128)}', space=vmem, size = 0x9000, scoped, tag = 'internal scratch']
  %s0 = inlined_call_operand.vmem [shape: bf16[8,768], index: 0, kind: input, shape index: {}]
  %s1 = inlined_call_operand.vmem [shape: bf16[768,768], index: 1, kind: input, shape index: {}]
  %s2 = inlined_call_operand.vmem [shape: f32[1,768], index: 2, kind: input, shape index: {}]
  %s3 = inlined_call_operand.vmem [shape: bf16[768,384], index: 3, kind: input, shape index: {}]
  %s4 = inlined_call_operand.vmem [shape: f32[1,384], index: 4, kind: input, shape index: {}]
  %s5 = inlined_call_operand.vmem [shape: bf16[384,128], index: 5, kind: input, shape index: {}]
  %s6 = inlined_call_operand.vmem [shape: f32[1,128], index: 6, kind: input, shape index: {}]
  %s7 = inlined_call_operand.vmem [shape: f32[128,2], index: 7, kind: input, shape index: {}]
  %s8 = inlined_call_operand.vmem [shape: f32[1,2], index: 8, kind: input, shape index: {}]
  %s9 = inlined_call_operand.vmem [shape: s32[8,1], index: 9, kind: input, shape index: {}]
  %s10 = inlined_call_operand.vmem [shape: f32[8,2], index: 10, kind: output, shape index: {0}]
  %s11 = inlined_call_operand.hbm [shape: f32[1,1], index: 11, kind: output, shape index: {1}]
  %12 = xla_tuple %s10, %s11
  %s13 = sld [smem:[#allocation0]]
  $region58: #{forward.1} parent=0
    _
  %s15 = ssub.s32 1, %s13
  %s16 = scalar_select 0, %s15, %s13
  $region1: #{forward.1} parent=0
    #allocation2 [shape = 'u8[512]{0}', space=smem, size = 0x200, scoped, tag = 'output window, operand 1, single buffered']
    #allocation3 [shape = 's32[1]{0}', space=sflag, size = 0x4, scoped, tag = 'scoped memory for forward.1']
    %17 = vsyncpa [#allocation3], 0
    // Predicated region
    $region2: #{forward.1} parent=1 // pred_check
      _
    $region3: #{forward.1} parent=1 // pred_check_branch
      %19 = sbr.rel (0) target = $region5
    $region4: #{forward.1} parent=1 // pred_region
      _
    $region5: #{forward.1} parent=1 // pred_fallthru
      _
    // Predicated region
    $region6: #{forward.1} parent=1 // pred_check
      _
    $region7: #{forward.1} parent=1 // pred_check_branch
      %21 = sbr.rel (0) target = $region9
    $region8: #{forward.1} parent=1 // pred_region
      _
    $region9: #{forward.1} parent=1 // pred_fallthru
      _
    // Predicated region
    $region10: #{forward.1} parent=1 // pred_check
      _
    $region11: #{forward.1} parent=1 // pred_check_branch
      %23 = sbr.rel (0) target = $region13
    $region12: #{forward.1} parent=1 // pred_region
      _
    $region13: #{forward.1} parent=1 // pred_fallthru
      _
    // Predicated region
    $region14: #{forward.1} parent=1 // pred_check
      _
    $region15: #{forward.1} parent=1 // pred_check_branch
      %25 = sbr.rel (0) target = $region17
    $region16: #{forward.1} parent=1 // pred_region
      _
    $region17: #{forward.1} parent=1 // pred_fallthru
      _
    // Predicated region
    $region18: #{forward.1} parent=1 // pred_check
      _
    $region19: #{forward.1} parent=1 // pred_check_branch
      %27 = sbr.rel (0) target = $region21
    $region20: #{forward.1} parent=1 // pred_region
      _
    $region21: #{forward.1} parent=1 // pred_fallthru
      _
    // Predicated region
    $region22: #{forward.1} parent=1 // pred_check
      _
    $region23: #{forward.1} parent=1 // pred_check_branch
      %29 = sbr.rel (0) target = $region25
    $region24: #{forward.1} parent=1 // pred_region
      _
    $region25: #{forward.1} parent=1 // pred_fallthru
      _
    // Predicated region
    $region26: #{forward.1} parent=1 // pred_check
      _
    $region27: #{forward.1} parent=1 // pred_check_branch
      %31 = sbr.rel (0) target = $region29
    $region28: #{forward.1} parent=1 // pred_region
      _
    $region29: #{forward.1} parent=1 // pred_fallthru
      _
    // Predicated region
    $region30: #{forward.1} parent=1 // pred_check
      _
    $region31: #{forward.1} parent=1 // pred_check_branch
      %33 = sbr.rel (0) target = $region33
    $region32: #{forward.1} parent=1 // pred_region
      _
    $region33: #{forward.1} parent=1 // pred_fallthru
      _
    // Predicated region
    $region34: #{forward.1} parent=1 // pred_check
      _
    $region35: #{forward.1} parent=1 // pred_check_branch
      %35 = sbr.rel (0) target = $region37
    $region36: #{forward.1} parent=1 // pred_region
      _
    $region37: #{forward.1} parent=1 // pred_fallthru
      _
    // Predicated region
    $region38: #{forward.1} parent=1 // pred_check
      _
    $region39: #{forward.1} parent=1 // pred_check_branch
      %37 = sbr.rel (0) target = $region41
    $region40: #{forward.1} parent=1 // pred_region
      _
    $region41: #{forward.1} parent=1 // pred_fallthru
      _
    %v38 = vld [vmem:[%s0] sm:$0xff]
    %v39 = vld [vmem:[%s0 + $0x8] sm:$0xff]
    %v40 = vld [vmem:[%s0 + $0x10] sm:$0xff]
    %v41 = vld [vmem:[%s1] sm:$0xff]
    %v42 = vld [vmem:[%s1 + $0x8] sm:$0xff]
    %v43 = vld [vmem:[%s1 + $0x10] sm:$0xff]
    %v44 = vld [vmem:[%s1 + $0x18] sm:$0xff]
    %v45 = vld [vmem:[%s1 + $0x20] sm:$0xff]
    %v46 = vld [vmem:[%s1 + $0x28] sm:$0xff]
    %v47 = vld [vmem:[%s1 + $0x30] sm:$0xff]
    %v48 = vld [vmem:[%s1 + $0x38] sm:$0xff]
    %v49 = vld [vmem:[%s1 + $0x40] sm:$0xff]
    %v50 = vld [vmem:[%s1 + $0x48] sm:$0xff]
    %v51 = vld [vmem:[%s1 + $0x50] sm:$0xff]
    %v52 = vld [vmem:[%s1 + $0x58] sm:$0xff]
    %v53 = vld [vmem:[%s1 + $0x60] sm:$0xff]
    %v54 = vld [vmem:[%s1 + $0x68] sm:$0xff]
    %v55 = vld [vmem:[%s1 + $0x70] sm:$0xff]
    %v56 = vld [vmem:[%s1 + $0x78] sm:$0xff]
    %v57 = vld [vmem:[%s1 + $0x80] sm:$0xff]
    %v58 = vld [vmem:[%s1 + $0x88] sm:$0xff]
    %v59 = vld [vmem:[%s1 + $0x90] sm:$0xff]
    %v60 = vld [vmem:[%s1 + $0x98] sm:$0xff]
    %v61 = vld [vmem:[%s1 + $0xa0] sm:$0xff]
    %v62 = vld [vmem:[%s1 + $0xa8] sm:$0xff]
    %v63 = vld [vmem:[%s1 + $0xb0] sm:$0xff]
    %v64 = vld [vmem:[%s1 + $0xb8] sm:$0xff]
    %v65 = vld [vmem:[%s1 + $0xc0] sm:$0xff]
    %v66 = vld [vmem:[%s1 + $0xc8] sm:$0xff]
    %v67 = vld [vmem:[%s1 + $0xd0] sm:$0xff]
    %v68 = vld [vmem:[%s1 + $0xd8] sm:$0xff]
    %v69 = vld [vmem:[%s1 + $0xe0] sm:$0xff]
    %v70 = vld [vmem:[%s1 + $0xe8] sm:$0xff]
    %v71 = vld [vmem:[%s1 + $0xf0] sm:$0xff]
    %v72 = vld [vmem:[%s1 + $0xf8] sm:$0xff]
    %v73 = vld [vmem:[%s1 + $0x100] sm:$0xff]
    %v74 = vld [vmem:[%s1 + $0x108] sm:$0xff]
    %v75 = vld [vmem:[%s1 + $0x110] sm:$0xff]
    %v76 = vld [vmem:[%s1 + $0x118] sm:$0xff]
    %v77 = vld [vmem:[%s1 + $0x120] sm:$0xff]
    %v78 = vld [vmem:[%s1 + $0x128] sm:$0xff]
    %v79 = vld [vmem:[%s1 + $0x130] sm:$0xff]
    %v80 = vld [vmem:[%s1 + $0x138] sm:$0xff]
    %v81 = vld [vmem:[%s1 + $0x140] sm:$0xff]
    %v82 = vld [vmem:[%s1 + $0x148] sm:$0xff]
    %v83 = vld [vmem:[%s1 + $0x150] sm:$0xff]
    %v84 = vld [vmem:[%s1 + $0x158] sm:$0xff]
    %v85 = vld [vmem:[%s1 + $0x160] sm:$0xff]
    %v86 = vld [vmem:[%s1 + $0x168] sm:$0xff]
    %v87 = vld [vmem:[%s1 + $0x170] sm:$0xff]
    %v88 = vld [vmem:[%s1 + $0x178] sm:$0xff]
    %v89 = vld [vmem:[%s1 + $0x180] sm:$0xff]
    %v90 = vld [vmem:[%s1 + $0x188] sm:$0xff]
    %v91 = vld [vmem:[%s1 + $0x190] sm:$0xff]
    %v92 = vld [vmem:[%s1 + $0x198] sm:$0xff]
    %v93 = vld [vmem:[%s1 + $0x1a0] sm:$0xff]
    %v94 = vld [vmem:[%s1 + $0x1a8] sm:$0xff]
    %v95 = vld [vmem:[%s1 + $0x1b0] sm:$0xff]
    %v96 = vld [vmem:[%s1 + $0x1b8] sm:$0xff]
    %v97 = vld [vmem:[%s1 + $0x1c0] sm:$0xff]
    %v98 = vld [vmem:[%s1 + $0x1c8] sm:$0xff]
    %v99 = vld [vmem:[%s1 + $0x1d0] sm:$0xff]
    %v100 = vld [vmem:[%s1 + $0x1d8] sm:$0xff]
    %v101 = vld [vmem:[%s1 + $0x1e0] sm:$0xff]
    %v102 = vld [vmem:[%s1 + $0x1e8] sm:$0xff]
    %v103 = vld [vmem:[%s1 + $0x1f0] sm:$0xff]
    %v104 = vld [vmem:[%s1 + $0x1f8] sm:$0xff]
    %v105 = vld [vmem:[%s1 + $0x200] sm:$0xff]
    %v106 = vld [vmem:[%s1 + $0x208] sm:$0xff]
    %v107 = vld [vmem:[%s1 + $0x210] sm:$0xff]
    %v108 = vld [vmem:[%s1 + $0x218] sm:$0xff]
    %v109 = vld [vmem:[%s1 + $0x220] sm:$0xff]
    %v110 = vld [vmem:[%s1 + $0x228] sm:$0xff]
    %v111 = vld [vmem:[%s1 + $0x230] sm:$0xff]
    %v112 = vld [vmem:[%s1 + $0x238] sm:$0xff]
    %v113 = vld [vmem:[%s1 + $0x240] sm:$0xff]
    %v114 = vld [vmem:[%s1 + $0x248] sm:$0xff]
    %v115 = vld [vmem:[%s1 + $0x250] sm:$0xff]
    %v116 = vld [vmem:[%s1 + $0x258] sm:$0xff]
    %v117 = vld [vmem:[%s1 + $0x260] sm:$0xff]
    %v118 = vld [vmem:[%s1 + $0x268] sm:$0xff]
    %v119 = vld [vmem:[%s1 + $0x270] sm:$0xff]
    %v120 = vld [vmem:[%s1 + $0x278] sm:$0xff]
    %v121 = vld [vmem:[%s1 + $0x280] sm:$0xff]
    %v122 = vld [vmem:[%s1 + $0x288] sm:$0xff]
    %v123 = vld [vmem:[%s1 + $0x290] sm:$0xff]
    %v124 = vld [vmem:[%s1 + $0x298] sm:$0xff]
    %v125 = vld [vmem:[%s1 + $0x2a0] sm:$0xff]
    %v126 = vld [vmem:[%s1 + $0x2a8] sm:$0xff]
    %v127 = vld [vmem:[%s1 + $0x2b0] sm:$0xff]
    %v128 = vld [vmem:[%s1 + $0x2b8] sm:$0xff]
    %v129 = vld [vmem:[%s1 + $0x2c0] sm:$0xff]
    %v130 = vld [vmem:[%s1 + $0x2c8] sm:$0xff]
    %v131 = vld [vmem:[%s1 + $0x2d0] sm:$0xff]
    %v132 = vld [vmem:[%s1 + $0x2d8] sm:$0xff]
    %v133 = vld [vmem:[%s1 + $0x2e0] sm:$0xff]
    %v134 = vld [vmem:[%s1 + $0x2e8] sm:$0xff]
    %v135 = vld [vmem:[%s1 + $0x2f0] sm:$0xff]
    %v136 = vld [vmem:[%s1 + $0x2f8] sm:$0xff]
    %v137 = vld [vmem:[%s1 + $0x300] sm:$0xff]
    %v138 = vld [vmem:[%s1 + $0x308] sm:$0xff]
    %v139 = vld [vmem:[%s1 + $0x310] sm:$0xff]
    %v140 = vld [vmem:[%s1 + $0x318] sm:$0xff]
    %v141 = vld [vmem:[%s1 + $0x320] sm:$0xff]
    %v142 = vld [vmem:[%s1 + $0x328] sm:$0xff]
    %v143 = vld [vmem:[%s1 + $0x330] sm:$0xff]
    %v144 = vld [vmem:[%s1 + $0x338] sm:$0xff]
    %v145 = vld [vmem:[%s1 + $0x340] sm:$0xff]
    %v146 = vld [vmem:[%s1 + $0x348] sm:$0xff]
    %v147 = vld [vmem:[%s1 + $0x350] sm:$0xff]
    %v148 = vld [vmem:[%s1 + $0x358] sm:$0xff]
    %v149 = vld [vmem:[%s1 + $0x360] sm:$0xff]
    %v150 = vld [vmem:[%s1 + $0x368] sm:$0xff]
    %v151 = vld [vmem:[%s1 + $0x370] sm:$0xff]
    %v152 = vld [vmem:[%s1 + $0x378] sm:$0xff]
    %v153 = vld [vmem:[%s1 + $0x380] sm:$0xff]
    %v154 = vld [vmem:[%s1 + $0x388] sm:$0xff]
    %v155 = vld [vmem:[%s1 + $0x390] sm:$0xff]
    %v156 = vld [vmem:[%s1 + $0x398] sm:$0xff]
    %v157 = vld [vmem:[%s1 + $0x3a0] sm:$0xff]
    %v158 = vld [vmem:[%s1 + $0x3a8] sm:$0xff]
    %v159 = vld [vmem:[%s1 + $0x3b0] sm:$0xff]
    %v160 = vld [vmem:[%s1 + $0x3b8] sm:$0xff]
    %v161 = vld [vmem:[%s1 + $0x3c0] sm:$0xff]
    %v162 = vld [vmem:[%s1 + $0x3c8] sm:$0xff]
    %v163 = vld [vmem:[%s1 + $0x3d0] sm:$0xff]
    %v164 = vld [vmem:[%s1 + $0x3d8] sm:$0xff]
    %v165 = vld [vmem:[%s1 + $0x3e0] sm:$0xff]
    %v166 = vld [vmem:[%s1 + $0x3e8] sm:$0xff]
    %v167 = vld [vmem:[%s1 + $0x3f0] sm:$0xff]
    %v168 = vld [vmem:[%s1 + $0x3f8] sm:$0xff]
    %v169 = vld [vmem:[%s1 + $0x400] sm:$0xff]
    %v170 = vld [vmem:[%s1 + $0x408] sm:$0xff]
    %v171 = vld [vmem:[%s1 + $0x410] sm:$0xff]
    %v172 = vld [vmem:[%s1 + $0x418] sm:$0xff]
    %v173 = vld [vmem:[%s1 + $0x420] sm:$0xff]
    %v174 = vld [vmem:[%s1 + $0x428] sm:$0xff]
    %v175 = vld [vmem:[%s1 + $0x430] sm:$0xff]
    %v176 = vld [vmem:[%s1 + $0x438] sm:$0xff]
    %v177 = vld [vmem:[%s1 + $0x440] sm:$0xff]
    %v178 = vld [vmem:[%s1 + $0x448] sm:$0xff]
    %v179 = vld [vmem:[%s1 + $0x450] sm:$0xff]
    %v180 = vld [vmem:[%s1 + $0x458] sm:$0xff]
    %v181 = vld [vmem:[%s1 + $0x460] sm:$0xff]
    %v182 = vld [vmem:[%s1 + $0x468] sm:$0xff]
    %v183 = vld [vmem:[%s1 + $0x470] sm:$0xff]
    %v184 = vld [vmem:[%s1 + $0x478] sm:$0xff]
    %v185 = vld [vmem:[%s1 + $0x480] sm:$0xff]
    %v186 = vld [vmem:[%s1 + $0x488] sm:$0xff]
    %v187 = vld [vmem:[%s1 + $0x490] sm:$0xff]
    %v188 = vld [vmem:[%s1 + $0x498] sm:$0xff]
    %v189 = vld [vmem:[%s1 + $0x4a0] sm:$0xff]
    %v190 = vld [vmem:[%s1 + $0x4a8] sm:$0xff]
    %v191 = vld [vmem:[%s1 + $0x4b0] sm:$0xff]
    %v192 = vld [vmem:[%s1 + $0x4b8] sm:$0xff]
    %v193 = vld [vmem:[%s1 + $0x4c0] sm:$0xff]
    %v194 = vld [vmem:[%s1 + $0x4c8] sm:$0xff]
    %v195 = vld [vmem:[%s1 + $0x4d0] sm:$0xff]
    %v196 = vld [vmem:[%s1 + $0x4d8] sm:$0xff]
    %v197 = vld [vmem:[%s1 + $0x4e0] sm:$0xff]
    %v198 = vld [vmem:[%s1 + $0x4e8] sm:$0xff]
    %v199 = vld [vmem:[%s1 + $0x4f0] sm:$0xff]
    %v200 = vld [vmem:[%s1 + $0x4f8] sm:$0xff]
    %v201 = vld [vmem:[%s1 + $0x500] sm:$0xff]
    %v202 = vld [vmem:[%s1 + $0x508] sm:$0xff]
    %v203 = vld [vmem:[%s1 + $0x510] sm:$0xff]
    %v204 = vld [vmem:[%s1 + $0x518] sm:$0xff]
    %v205 = vld [vmem:[%s1 + $0x520] sm:$0xff]
    %v206 = vld [vmem:[%s1 + $0x528] sm:$0xff]
    %v207 = vld [vmem:[%s1 + $0x530] sm:$0xff]
    %v208 = vld [vmem:[%s1 + $0x538] sm:$0xff]
    %v209 = vld [vmem:[%s1 + $0x540] sm:$0xff]
    %v210 = vld [vmem:[%s1 + $0x548] sm:$0xff]
    %v211 = vld [vmem:[%s1 + $0x550] sm:$0xff]
    %v212 = vld [vmem:[%s1 + $0x558] sm:$0xff]
    %v213 = vld [vmem:[%s1 + $0x560] sm:$0xff]
    %v214 = vld [vmem:[%s1 + $0x568] sm:$0xff]
    %v215 = vld [vmem:[%s1 + $0x570] sm:$0xff]
    %v216 = vld [vmem:[%s1 + $0x578] sm:$0xff]
    %v217 = vld [vmem:[%s1 + $0x580] sm:$0xff]
    %v218 = vld [vmem:[%s1 + $0x588] sm:$0xff]
    %v219 = vld [vmem:[%s1 + $0x590] sm:$0xff]
    %v220 = vld [vmem:[%s1 + $0x598] sm:$0xff]
    %v221 = vld [vmem:[%s1 + $0x5a0] sm:$0xff]
    %v222 = vld [vmem:[%s1 + $0x5a8] sm:$0xff]
    %v223 = vld [vmem:[%s1 + $0x5b0] sm:$0xff]
    %v224 = vld [vmem:[%s1 + $0x5b8] sm:$0xff]
    %v225 = vld [vmem:[%s1 + $0x5c0] sm:$0xff]
    %v226 = vld [vmem:[%s1 + $0x5c8] sm:$0xff]
    %v227 = vld [vmem:[%s1 + $0x5d0] sm:$0xff]
    %v228 = vld [vmem:[%s1 + $0x5d8] sm:$0xff]
    %v229 = vld [vmem:[%s1 + $0x5e0] sm:$0xff]
    %v230 = vld [vmem:[%s1 + $0x5e8] sm:$0xff]
    %v231 = vld [vmem:[%s1 + $0x5f0] sm:$0xff]
    %v232 = vld [vmem:[%s1 + $0x5f8] sm:$0xff]
    %v233 = vld [vmem:[%s1 + $0x600] sm:$0xff]
    %v234 = vld [vmem:[%s1 + $0x608] sm:$0xff]
    %v235 = vld [vmem:[%s1 + $0x610] sm:$0xff]
    %v236 = vld [vmem:[%s1 + $0x618] sm:$0xff]
    %v237 = vld [vmem:[%s1 + $0x620] sm:$0xff]
    %v238 = vld [vmem:[%s1 + $0x628] sm:$0xff]
    %v239 = vld [vmem:[%s1 + $0x630] sm:$0xff]
    %v240 = vld [vmem:[%s1 + $0x638] sm:$0xff]
    %v241 = vld [vmem:[%s1 + $0x640] sm:$0xff]
    %v242 = vld [vmem:[%s1 + $0x648] sm:$0xff]
    %v243 = vld [vmem:[%s1 + $0x650] sm:$0xff]
    %v244 = vld [vmem:[%s1 + $0x658] sm:$0xff]
    %v245 = vld [vmem:[%s1 + $0x660] sm:$0xff]
    %v246 = vld [vmem:[%s1 + $0x668] sm:$0xff]
    %v247 = vld [vmem:[%s1 + $0x670] sm:$0xff]
    %v248 = vld [vmem:[%s1 + $0x678] sm:$0xff]
    %v249 = vld [vmem:[%s1 + $0x680] sm:$0xff]
    %v250 = vld [vmem:[%s1 + $0x688] sm:$0xff]
    %v251 = vld [vmem:[%s1 + $0x690] sm:$0xff]
    %v252 = vld [vmem:[%s1 + $0x698] sm:$0xff]
    %v253 = vld [vmem:[%s1 + $0x6a0] sm:$0xff]
    %v254 = vld [vmem:[%s1 + $0x6a8] sm:$0xff]
    %v255 = vld [vmem:[%s1 + $0x6b0] sm:$0xff]
    %v256 = vld [vmem:[%s1 + $0x6b8] sm:$0xff]
    %v257 = vld [vmem:[%s1 + $0x6c0] sm:$0xff]
    %v258 = vld [vmem:[%s1 + $0x6c8] sm:$0xff]
    %v259 = vld [vmem:[%s1 + $0x6d0] sm:$0xff]
    %v260 = vld [vmem:[%s1 + $0x6d8] sm:$0xff]
    %v261 = vld [vmem:[%s1 + $0x6e0] sm:$0xff]
    %v262 = vld [vmem:[%s1 + $0x6e8] sm:$0xff]
    %v263 = vld [vmem:[%s1 + $0x6f0] sm:$0xff]
    %v264 = vld [vmem:[%s1 + $0x6f8] sm:$0xff]
    %v265 = vld [vmem:[%s1 + $0x700] sm:$0xff]
    %v266 = vld [vmem:[%s1 + $0x708] sm:$0xff]
    %v267 = vld [vmem:[%s1 + $0x710] sm:$0xff]
    %v268 = vld [vmem:[%s1 + $0x718] sm:$0xff]
    %v269 = vld [vmem:[%s1 + $0x720] sm:$0xff]
    %v270 = vld [vmem:[%s1 + $0x728] sm:$0xff]
    %v271 = vld [vmem:[%s1 + $0x730] sm:$0xff]
    %v272 = vld [vmem:[%s1 + $0x738] sm:$0xff]
    %v273 = vld [vmem:[%s1 + $0x740] sm:$0xff]
    %v274 = vld [vmem:[%s1 + $0x748] sm:$0xff]
    %v275 = vld [vmem:[%s1 + $0x750] sm:$0xff]
    %v276 = vld [vmem:[%s1 + $0x758] sm:$0xff]
    %v277 = vld [vmem:[%s1 + $0x760] sm:$0xff]
    %v278 = vld [vmem:[%s1 + $0x768] sm:$0xff]
    %v279 = vld [vmem:[%s1 + $0x770] sm:$0xff]
    %v280 = vld [vmem:[%s1 + $0x778] sm:$0xff]
    %v281 = vld [vmem:[%s1 + $0x780] sm:$0xff]
    %v282 = vld [vmem:[%s1 + $0x788] sm:$0xff]
    %v283 = vld [vmem:[%s1 + $0x790] sm:$0xff]
    %v284 = vld [vmem:[%s1 + $0x798] sm:$0xff]
    %v285 = vld [vmem:[%s1 + $0x7a0] sm:$0xff]
    %v286 = vld [vmem:[%s1 + $0x7a8] sm:$0xff]
    %v287 = vld [vmem:[%s1 + $0x7b0] sm:$0xff]
    %v288 = vld [vmem:[%s1 + $0x7b8] sm:$0xff]
    %v289 = vld [vmem:[%s1 + $0x7c0] sm:$0xff]
    %v290 = vld [vmem:[%s1 + $0x7c8] sm:$0xff]
    %v291 = vld [vmem:[%s1 + $0x7d0] sm:$0xff]
    %v292 = vld [vmem:[%s1 + $0x7d8] sm:$0xff]
    %v293 = vld [vmem:[%s1 + $0x7e0] sm:$0xff]
    %v294 = vld [vmem:[%s1 + $0x7e8] sm:$0xff]
    %v295 = vld [vmem:[%s1 + $0x7f0] sm:$0xff]
    %v296 = vld [vmem:[%s1 + $0x7f8] sm:$0xff]
    %v297 = vld [vmem:[%s1 + $0x800] sm:$0xff]
    %v298 = vld [vmem:[%s1 + $0x808] sm:$0xff]
    %v299 = vld [vmem:[%s1 + $0x810] sm:$0xff]
    %v300 = vld [vmem:[%s1 + $0x818] sm:$0xff]
    %v301 = vld [vmem:[%s1 + $0x820] sm:$0xff]
    %v302 = vld [vmem:[%s1 + $0x828] sm:$0xff]
    %v303 = vld [vmem:[%s1 + $0x830] sm:$0xff]
    %v304 = vld [vmem:[%s1 + $0x838] sm:$0xff]
    %v305 = vld [vmem:[%s1 + $0x840] sm:$0xff]
    %v306 = vld [vmem:[%s1 + $0x848] sm:$0xff]
    %v307 = vld [vmem:[%s1 + $0x850] sm:$0xff]
    %v308 = vld [vmem:[%s1 + $0x858] sm:$0xff]
    %v309 = vld [vmem:[%s1 + $0x860] sm:$0xff]
    %v310 = vld [vmem:[%s1 + $0x868] sm:$0xff]
    %v311 = vld [vmem:[%s1 + $0x870] sm:$0xff]
    %v312 = vld [vmem:[%s1 + $0x878] sm:$0xff]
    %v313 = vld [vmem:[%s1 + $0x880] sm:$0xff]
    %v314 = vld [vmem:[%s1 + $0x888] sm:$0xff]
    %v315 = vld [vmem:[%s1 + $0x890] sm:$0xff]
    %v316 = vld [vmem:[%s1 + $0x898] sm:$0xff]
    %v317 = vld [vmem:[%s1 + $0x8a0] sm:$0xff]
    %v318 = vld [vmem:[%s1 + $0x8a8] sm:$0xff]
    %v319 = vld [vmem:[%s1 + $0x8b0] sm:$0xff]
    %v320 = vld [vmem:[%s1 + $0x8b8] sm:$0xff]
    %v321 = vld [vmem:[%s1 + $0x8c0] sm:$0xff]
    %v322 = vld [vmem:[%s1 + $0x8c8] sm:$0xff]
    %v323 = vld [vmem:[%s1 + $0x8d0] sm:$0xff]
    %v324 = vld [vmem:[%s1 + $0x8d8] sm:$0xff]
    %v325 = vld [vmem:[%s1 + $0x8e0] sm:$0xff]
    %v326 = vld [vmem:[%s1 + $0x8e8] sm:$0xff]
    %v327 = vld [vmem:[%s1 + $0x8f0] sm:$0xff]
    %v328 = vld [vmem:[%s1 + $0x8f8] sm:$0xff]
    %v329 = vld [vmem:[%s2] sm:$0x3f]
    %v331 = vperm.slane %v329, 0
    %v332 = vperm.slane %v329, 1
    %v333 = vperm.slane %v329, 2
    %v334 = vperm.slane %v329, 3
    %v335 = vperm.slane %v329, 4
    %v336 = vperm.slane %v329, 5
    %v346 = vunpack.c.l.b16 %v38
    %v347 = vunpack.c.h.b16 %v38
    %v348 = vunpack.c.l.b16 %v39
    %v349 = vunpack.c.h.b16 %v39
    %v350 = vunpack.c.l.b16 %v40
    %v351 = vunpack.c.h.b16 %v40
    %v352 = vpack.c.b16 %v346, %v346
    %v353 = vpack.c.b16 %v347, %v347
    %v354 = vpack.c.b16 %v348, %v348
    %v355 = vpack.c.b16 %v349, %v349
    %v356 = vpack.c.b16 %v350, %v350
    %v357 = vpack.c.b16 %v351, %v351
    %v652 = vunpack.c.l.b16 %v41
    %v653 = vunpack.c.h.b16 %v41
    %v654 = vunpack.c.l.b16 %v42
    %v655 = vunpack.c.h.b16 %v42
    %v656 = vunpack.c.l.b16 %v43
    %v657 = vunpack.c.h.b16 %v43
    %v658 = vunpack.c.l.b16 %v44
    %v659 = vunpack.c.h.b16 %v44
    %v660 = vunpack.c.l.b16 %v45
    %v661 = vunpack.c.h.b16 %v45
    %v662 = vunpack.c.l.b16 %v46
    %v663 = vunpack.c.h.b16 %v46
    %v664 = vunpack.c.l.b16 %v47
    %v665 = vunpack.c.h.b16 %v47
    %v666 = vunpack.c.l.b16 %v48
    %v667 = vunpack.c.h.b16 %v48
    %v668 = vunpack.c.l.b16 %v49
    %v669 = vunpack.c.h.b16 %v49
    %v670 = vunpack.c.l.b16 %v50
    %v671 = vunpack.c.h.b16 %v50
    %v672 = vunpack.c.l.b16 %v51
    %v673 = vunpack.c.h.b16 %v51
    %v674 = vunpack.c.l.b16 %v52
    %v675 = vunpack.c.h.b16 %v52
    %v676 = vunpack.c.l.b16 %v53
    %v677 = vunpack.c.h.b16 %v53
    %v678 = vunpack.c.l.b16 %v54
    %v679 = vunpack.c.h.b16 %v54
    %v680 = vunpack.c.l.b16 %v55
    %v681 = vunpack.c.h.b16 %v55
    %v682 = vunpack.c.l.b16 %v56
    %v683 = vunpack.c.h.b16 %v56
    %v684 = vunpack.c.l.b16 %v57
    %v685 = vunpack.c.h.b16 %v57
    %v686 = vunpack.c.l.b16 %v58
    %v687 = vunpack.c.h.b16 %v58
    %v688 = vunpack.c.l.b16 %v59
    %v689 = vunpack.c.h.b16 %v59
    %v690 = vunpack.c.l.b16 %v60
    %v691 = vunpack.c.h.b16 %v60
    %v692 = vunpack.c.l.b16 %v61
    %v693 = vunpack.c.h.b16 %v61
    %v694 = vunpack.c.l.b16 %v62
    %v695 = vunpack.c.h.b16 %v62
    %v696 = vunpack.c.l.b16 %v63
    %v697 = vunpack.c.h.b16 %v63
    %v698 = vunpack.c.l.b16 %v64
    %v699 = vunpack.c.h.b16 %v64
    %v700 = vunpack.c.l.b16 %v65
    %v701 = vunpack.c.h.b16 %v65
    %v702 = vunpack.c.l.b16 %v66
    %v703 = vunpack.c.h.b16 %v66
    %v704 = vunpack.c.l.b16 %v67
    %v705 = vunpack.c.h.b16 %v67
    %v706 = vunpack.c.l.b16 %v68
    %v707 = vunpack.c.h.b16 %v68
    %v708 = vunpack.c.l.b16 %v69
    %v709 = vunpack.c.h.b16 %v69
    %v710 = vunpack.c.l.b16 %v70
    %v711 = vunpack.c.h.b16 %v70
    %v712 = vunpack.c.l.b16 %v71
    %v713 = vunpack.c.h.b16 %v71
    %v714 = vunpack.c.l.b16 %v72
    %v715 = vunpack.c.h.b16 %v72
    %v716 = vunpack.c.l.b16 %v73
    %v717 = vunpack.c.h.b16 %v73
    %v718 = vunpack.c.l.b16 %v74
    %v719 = vunpack.c.h.b16 %v74
    %v720 = vunpack.c.l.b16 %v75
    %v721 = vunpack.c.h.b16 %v75
    %v722 = vunpack.c.l.b16 %v76
    %v723 = vunpack.c.h.b16 %v76
    %v724 = vunpack.c.l.b16 %v77
    %v725 = vunpack.c.h.b16 %v77
    %v726 = vunpack.c.l.b16 %v78
    %v727 = vunpack.c.h.b16 %v78
    %v728 = vunpack.c.l.b16 %v79
    %v729 = vunpack.c.h.b16 %v79
    %v730 = vunpack.c.l.b16 %v80
    %v731 = vunpack.c.h.b16 %v80
    %v732 = vunpack.c.l.b16 %v81
    %v733 = vunpack.c.h.b16 %v81
    %v734 = vunpack.c.l.b16 %v82
    %v735 = vunpack.c.h.b16 %v82
    %v736 = vunpack.c.l.b16 %v83
    %v737 = vunpack.c.h.b16 %v83
    %v738 = vunpack.c.l.b16 %v84
    %v739 = vunpack.c.h.b16 %v84
    %v740 = vunpack.c.l.b16 %v85
    %v741 = vunpack.c.h.b16 %v85
    %v742 = vunpack.c.l.b16 %v86
    %v743 = vunpack.c.h.b16 %v86
    %v744 = vunpack.c.l.b16 %v87
    %v745 = vunpack.c.h.b16 %v87
    %v746 = vunpack.c.l.b16 %v88
    %v747 = vunpack.c.h.b16 %v88
    %v748 = vunpack.c.l.b16 %v89
    %v749 = vunpack.c.h.b16 %v89
    %v750 = vunpack.c.l.b16 %v90
    %v751 = vunpack.c.h.b16 %v90
    %v752 = vunpack.c.l.b16 %v91
    %v753 = vunpack.c.h.b16 %v91
    %v754 = vunpack.c.l.b16 %v92
    %v755 = vunpack.c.h.b16 %v92
    %v756 = vunpack.c.l.b16 %v93
    %v757 = vunpack.c.h.b16 %v93
    %v758 = vunpack.c.l.b16 %v94
    %v759 = vunpack.c.h.b16 %v94
    %v760 = vunpack.c.l.b16 %v95
    %v761 = vunpack.c.h.b16 %v95
    %v762 = vunpack.c.l.b16 %v96
    %v763 = vunpack.c.h.b16 %v96
    %v764 = vunpack.c.l.b16 %v97
    %v765 = vunpack.c.h.b16 %v97
    %v766 = vunpack.c.l.b16 %v98
    %v767 = vunpack.c.h.b16 %v98
    %v768 = vunpack.c.l.b16 %v99
    %v769 = vunpack.c.h.b16 %v99
    %v770 = vunpack.c.l.b16 %v100
    %v771 = vunpack.c.h.b16 %v100
    %v772 = vunpack.c.l.b16 %v101
    %v773 = vunpack.c.h.b16 %v101
    %v774 = vunpack.c.l.b16 %v102
    %v775 = vunpack.c.h.b16 %v102
    %v776 = vunpack.c.l.b16 %v103
    %v777 = vunpack.c.h.b16 %v103
    %v778 = vunpack.c.l.b16 %v104
    %v779 = vunpack.c.h.b16 %v104
    %v780 = vunpack.c.l.b16 %v105
    %v781 = vunpack.c.h.b16 %v105
    %v782 = vunpack.c.l.b16 %v106
    %v783 = vunpack.c.h.b16 %v106
    %v784 = vunpack.c.l.b16 %v107
    %v785 = vunpack.c.h.b16 %v107
    %v786 = vunpack.c.l.b16 %v108
    %v787 = vunpack.c.h.b16 %v108
    %v788 = vunpack.c.l.b16 %v109
    %v789 = vunpack.c.h.b16 %v109
    %v790 = vunpack.c.l.b16 %v110
    %v791 = vunpack.c.h.b16 %v110
    %v792 = vunpack.c.l.b16 %v111
    %v793 = vunpack.c.h.b16 %v111
    %v794 = vunpack.c.l.b16 %v112
    %v795 = vunpack.c.h.b16 %v112
    %v796 = vunpack.c.l.b16 %v113
    %v797 = vunpack.c.h.b16 %v113
    %v798 = vunpack.c.l.b16 %v114
    %v799 = vunpack.c.h.b16 %v114
    %v800 = vunpack.c.l.b16 %v115
    %v801 = vunpack.c.h.b16 %v115
    %v802 = vunpack.c.l.b16 %v116
    %v803 = vunpack.c.h.b16 %v116
    %v804 = vunpack.c.l.b16 %v117
    %v805 = vunpack.c.h.b16 %v117
    %v806 = vunpack.c.l.b16 %v118
    %v807 = vunpack.c.h.b16 %v118
    %v808 = vunpack.c.l.b16 %v119
    %v809 = vunpack.c.h.b16 %v119
    %v810 = vunpack.c.l.b16 %v120
    %v811 = vunpack.c.h.b16 %v120
    %v812 = vunpack.c.l.b16 %v121
    %v813 = vunpack.c.h.b16 %v121
    %v814 = vunpack.c.l.b16 %v122
    %v815 = vunpack.c.h.b16 %v122
    %v816 = vunpack.c.l.b16 %v123
    %v817 = vunpack.c.h.b16 %v123
    %v818 = vunpack.c.l.b16 %v124
    %v819 = vunpack.c.h.b16 %v124
    %v820 = vunpack.c.l.b16 %v125
    %v821 = vunpack.c.h.b16 %v125
    %v822 = vunpack.c.l.b16 %v126
    %v823 = vunpack.c.h.b16 %v126
    %v824 = vunpack.c.l.b16 %v127
    %v825 = vunpack.c.h.b16 %v127
    %v826 = vunpack.c.l.b16 %v128
    %v827 = vunpack.c.h.b16 %v128
    %v828 = vunpack.c.l.b16 %v129
    %v829 = vunpack.c.h.b16 %v129
    %v830 = vunpack.c.l.b16 %v130
    %v831 = vunpack.c.h.b16 %v130
    %v832 = vunpack.c.l.b16 %v131
    %v833 = vunpack.c.h.b16 %v131
    %v834 = vunpack.c.l.b16 %v132
    %v835 = vunpack.c.h.b16 %v132
    %v836 = vunpack.c.l.b16 %v133
    %v837 = vunpack.c.h.b16 %v133
    %v838 = vunpack.c.l.b16 %v134
    %v839 = vunpack.c.h.b16 %v134
    %v840 = vunpack.c.l.b16 %v135
    %v841 = vunpack.c.h.b16 %v135
    %v842 = vunpack.c.l.b16 %v136
    %v843 = vunpack.c.h.b16 %v136
    %v844 = vunpack.c.l.b16 %v137
    %v845 = vunpack.c.h.b16 %v137
    %v846 = vunpack.c.l.b16 %v138
    %v847 = vunpack.c.h.b16 %v138
    %v848 = vunpack.c.l.b16 %v139
    %v849 = vunpack.c.h.b16 %v139
    %v850 = vunpack.c.l.b16 %v140
    %v851 = vunpack.c.h.b16 %v140
    %v852 = vunpack.c.l.b16 %v141
    %v853 = vunpack.c.h.b16 %v141
    %v854 = vunpack.c.l.b16 %v142
    %v855 = vunpack.c.h.b16 %v142
    %v856 = vunpack.c.l.b16 %v143
    %v857 = vunpack.c.h.b16 %v143
    %v858 = vunpack.c.l.b16 %v144
    %v859 = vunpack.c.h.b16 %v144
    %v860 = vunpack.c.l.b16 %v145
    %v861 = vunpack.c.h.b16 %v145
    %v862 = vunpack.c.l.b16 %v146
    %v863 = vunpack.c.h.b16 %v146
    %v864 = vunpack.c.l.b16 %v147
    %v865 = vunpack.c.h.b16 %v147
    %v866 = vunpack.c.l.b16 %v148
    %v867 = vunpack.c.h.b16 %v148
    %v868 = vunpack.c.l.b16 %v149
    %v869 = vunpack.c.h.b16 %v149
    %v870 = vunpack.c.l.b16 %v150
    %v871 = vunpack.c.h.b16 %v150
    %v872 = vunpack.c.l.b16 %v151
    %v873 = vunpack.c.h.b16 %v151
    %v874 = vunpack.c.l.b16 %v152
    %v875 = vunpack.c.h.b16 %v152
    %v876 = vunpack.c.l.b16 %v153
    %v877 = vunpack.c.h.b16 %v153
    %v878 = vunpack.c.l.b16 %v154
    %v879 = vunpack.c.h.b16 %v154
    %v880 = vunpack.c.l.b16 %v155
    %v881 = vunpack.c.h.b16 %v155
    %v882 = vunpack.c.l.b16 %v156
    %v883 = vunpack.c.h.b16 %v156
    %v884 = vunpack.c.l.b16 %v157
    %v885 = vunpack.c.h.b16 %v157
    %v886 = vunpack.c.l.b16 %v158
    %v887 = vunpack.c.h.b16 %v158
    %v888 = vunpack.c.l.b16 %v159
    %v889 = vunpack.c.h.b16 %v159
    %v890 = vunpack.c.l.b16 %v160
    %v891 = vunpack.c.h.b16 %v160
    %v892 = vunpack.c.l.b16 %v161
    %v893 = vunpack.c.h.b16 %v161
    %v894 = vunpack.c.l.b16 %v162
    %v895 = vunpack.c.h.b16 %v162
    %v896 = vunpack.c.l.b16 %v163
    %v897 = vunpack.c.h.b16 %v163
    %v898 = vunpack.c.l.b16 %v164
    %v899 = vunpack.c.h.b16 %v164
    %v900 = vunpack.c.l.b16 %v165
    %v901 = vunpack.c.h.b16 %v165
    %v902 = vunpack.c.l.b16 %v166
    %v903 = vunpack.c.h.b16 %v166
    %v904 = vunpack.c.l.b16 %v167
    %v905 = vunpack.c.h.b16 %v167
    %v906 = vunpack.c.l.b16 %v168
    %v907 = vunpack.c.h.b16 %v168
    %v908 = vunpack.c.l.b16 %v169
    %v909 = vunpack.c.h.b16 %v169
    %v910 = vunpack.c.l.b16 %v170
    %v911 = vunpack.c.h.b16 %v170
    %v912 = vunpack.c.l.b16 %v171
    %v913 = vunpack.c.h.b16 %v171
    %v914 = vunpack.c.l.b16 %v172
    %v915 = vunpack.c.h.b16 %v172
    %v916 = vunpack.c.l.b16 %v173
    %v917 = vunpack.c.h.b16 %v173
    %v918 = vunpack.c.l.b16 %v174
    %v919 = vunpack.c.h.b16 %v174
    %v920 = vunpack.c.l.b16 %v175
    %v921 = vunpack.c.h.b16 %v175
    %v922 = vunpack.c.l.b16 %v176
    %v923 = vunpack.c.h.b16 %v176
    %v924 = vunpack.c.l.b16 %v177
    %v925 = vunpack.c.h.b16 %v177
    %v926 = vunpack.c.l.b16 %v178
    %v927 = vunpack.c.h.b16 %v178
    %v928 = vunpack.c.l.b16 %v179
    %v929 = vunpack.c.h.b16 %v179
    %v930 = vunpack.c.l.b16 %v180
    %v931 = vunpack.c.h.b16 %v180
    %v932 = vunpack.c.l.b16 %v181
    %v933 = vunpack.c.h.b16 %v181
    %v934 = vunpack.c.l.b16 %v182
    %v935 = vunpack.c.h.b16 %v182
    %v936 = vunpack.c.l.b16 %v183
    %v937 = vunpack.c.h.b16 %v183
    %v938 = vunpack.c.l.b16 %v184
    %v939 = vunpack.c.h.b16 %v184
    %v940 = vunpack.c.l.b16 %v185
    %v941 = vunpack.c.h.b16 %v185
    %v942 = vunpack.c.l.b16 %v186
    %v943 = vunpack.c.h.b16 %v186
    %v944 = vunpack.c.l.b16 %v187
    %v945 = vunpack.c.h.b16 %v187
    %v946 = vunpack.c.l.b16 %v188
    %v947 = vunpack.c.h.b16 %v188
    %v948 = vunpack.c.l.b16 %v189
    %v949 = vunpack.c.h.b16 %v189
    %v950 = vunpack.c.l.b16 %v190
    %v951 = vunpack.c.h.b16 %v190
    %v952 = vunpack.c.l.b16 %v191
    %v953 = vunpack.c.h.b16 %v191
    %v954 = vunpack.c.l.b16 %v192
    %v955 = vunpack.c.h.b16 %v192
    %v956 = vunpack.c.l.b16 %v193
    %v957 = vunpack.c.h.b16 %v193
    %v958 = vunpack.c.l.b16 %v194
    %v959 = vunpack.c.h.b16 %v194
    %v960 = vunpack.c.l.b16 %v195
    %v961 = vunpack.c.h.b16 %v195
    %v962 = vunpack.c.l.b16 %v196
    %v963 = vunpack.c.h.b16 %v196
    %v964 = vunpack.c.l.b16 %v197
    %v965 = vunpack.c.h.b16 %v197
    %v966 = vunpack.c.l.b16 %v198
    %v967 = vunpack.c.h.b16 %v198
    %v968 = vunpack.c.l.b16 %v199
    %v969 = vunpack.c.h.b16 %v199
    %v970 = vunpack.c.l.b16 %v200
    %v971 = vunpack.c.h.b16 %v200
    %v972 = vunpack.c.l.b16 %v201
    %v973 = vunpack.c.h.b16 %v201
    %v974 = vunpack.c.l.b16 %v202
    %v975 = vunpack.c.h.b16 %v202
    %v976 = vunpack.c.l.b16 %v203
    %v977 = vunpack.c.h.b16 %v203
    %v978 = vunpack.c.l.b16 %v204
    %v979 = vunpack.c.h.b16 %v204
    %v980 = vunpack.c.l.b16 %v205
    %v981 = vunpack.c.h.b16 %v205
    %v982 = vunpack.c.l.b16 %v206
    %v983 = vunpack.c.h.b16 %v206
    %v984 = vunpack.c.l.b16 %v207
    %v985 = vunpack.c.h.b16 %v207
    %v986 = vunpack.c.l.b16 %v208
    %v987 = vunpack.c.h.b16 %v208
    %v988 = vunpack.c.l.b16 %v209
    %v989 = vunpack.c.h.b16 %v209
    %v990 = vunpack.c.l.b16 %v210
    %v991 = vunpack.c.h.b16 %v210
    %v992 = vunpack.c.l.b16 %v211
    %v993 = vunpack.c.h.b16 %v211
    %v994 = vunpack.c.l.b16 %v212
    %v995 = vunpack.c.h.b16 %v212
    %v996 = vunpack.c.l.b16 %v213
    %v997 = vunpack.c.h.b16 %v213
    %v998 = vunpack.c.l.b16 %v214
    %v999 = vunpack.c.h.b16 %v214
    %v1000 = vunpack.c.l.b16 %v215
    %v1001 = vunpack.c.h.b16 %v215
    %v1002 = vunpack.c.l.b16 %v216
    %v1003 = vunpack.c.h.b16 %v216
    %v1004 = vunpack.c.l.b16 %v217
    %v1005 = vunpack.c.h.b16 %v217
    %v1006 = vunpack.c.l.b16 %v218
    %v1007 = vunpack.c.h.b16 %v218
    %v1008 = vunpack.c.l.b16 %v219
    %v1009 = vunpack.c.h.b16 %v219
    %v1010 = vunpack.c.l.b16 %v220
    %v1011 = vunpack.c.h.b16 %v220
    %v1012 = vunpack.c.l.b16 %v221
    %v1013 = vunpack.c.h.b16 %v221
    %v1014 = vunpack.c.l.b16 %v222
    %v1015 = vunpack.c.h.b16 %v222
    %v1016 = vunpack.c.l.b16 %v223
    %v1017 = vunpack.c.h.b16 %v223
    %v1018 = vunpack.c.l.b16 %v224
    %v1019 = vunpack.c.h.b16 %v224
    %v1020 = vunpack.c.l.b16 %v225
    %v1021 = vunpack.c.h.b16 %v225
    %v1022 = vunpack.c.l.b16 %v226
    %v1023 = vunpack.c.h.b16 %v226
    %v1024 = vunpack.c.l.b16 %v227
    %v1025 = vunpack.c.h.b16 %v227
    %v1026 = vunpack.c.l.b16 %v228
    %v1027 = vunpack.c.h.b16 %v228
    %v1028 = vunpack.c.l.b16 %v229
    %v1029 = vunpack.c.h.b16 %v229
    %v1030 = vunpack.c.l.b16 %v230
    %v1031 = vunpack.c.h.b16 %v230
    %v1032 = vunpack.c.l.b16 %v231
    %v1033 = vunpack.c.h.b16 %v231
    %v1034 = vunpack.c.l.b16 %v232
    %v1035 = vunpack.c.h.b16 %v232
    %v1036 = vunpack.c.l.b16 %v233
    %v1037 = vunpack.c.h.b16 %v233
    %v1038 = vunpack.c.l.b16 %v234
    %v1039 = vunpack.c.h.b16 %v234
    %v1040 = vunpack.c.l.b16 %v235
    %v1041 = vunpack.c.h.b16 %v235
    %v1042 = vunpack.c.l.b16 %v236
    %v1043 = vunpack.c.h.b16 %v236
    %v1044 = vunpack.c.l.b16 %v237
    %v1045 = vunpack.c.h.b16 %v237
    %v1046 = vunpack.c.l.b16 %v238
    %v1047 = vunpack.c.h.b16 %v238
    %v1048 = vunpack.c.l.b16 %v239
    %v1049 = vunpack.c.h.b16 %v239
    %v1050 = vunpack.c.l.b16 %v240
    %v1051 = vunpack.c.h.b16 %v240
    %v1052 = vunpack.c.l.b16 %v241
    %v1053 = vunpack.c.h.b16 %v241
    %v1054 = vunpack.c.l.b16 %v242
    %v1055 = vunpack.c.h.b16 %v242
    %v1056 = vunpack.c.l.b16 %v243
    %v1057 = vunpack.c.h.b16 %v243
    %v1058 = vunpack.c.l.b16 %v244
    %v1059 = vunpack.c.h.b16 %v244
    %v1060 = vunpack.c.l.b16 %v245
    %v1061 = vunpack.c.h.b16 %v245
    %v1062 = vunpack.c.l.b16 %v246
    %v1063 = vunpack.c.h.b16 %v246
    %v1064 = vunpack.c.l.b16 %v247
    %v1065 = vunpack.c.h.b16 %v247
    %v1066 = vunpack.c.l.b16 %v248
    %v1067 = vunpack.c.h.b16 %v248
    %v1068 = vunpack.c.l.b16 %v249
    %v1069 = vunpack.c.h.b16 %v249
    %v1070 = vunpack.c.l.b16 %v250
    %v1071 = vunpack.c.h.b16 %v250
    %v1072 = vunpack.c.l.b16 %v251
    %v1073 = vunpack.c.h.b16 %v251
    %v1074 = vunpack.c.l.b16 %v252
    %v1075 = vunpack.c.h.b16 %v252
    %v1076 = vunpack.c.l.b16 %v253
    %v1077 = vunpack.c.h.b16 %v253
    %v1078 = vunpack.c.l.b16 %v254
    %v1079 = vunpack.c.h.b16 %v254
    %v1080 = vunpack.c.l.b16 %v255
    %v1081 = vunpack.c.h.b16 %v255
    %v1082 = vunpack.c.l.b16 %v256
    %v1083 = vunpack.c.h.b16 %v256
    %v1084 = vunpack.c.l.b16 %v257
    %v1085 = vunpack.c.h.b16 %v257
    %v1086 = vunpack.c.l.b16 %v258
    %v1087 = vunpack.c.h.b16 %v258
    %v1088 = vunpack.c.l.b16 %v259
    %v1089 = vunpack.c.h.b16 %v259
    %v1090 = vunpack.c.l.b16 %v260
    %v1091 = vunpack.c.h.b16 %v260
    %v1092 = vunpack.c.l.b16 %v261
    %v1093 = vunpack.c.h.b16 %v261
    %v1094 = vunpack.c.l.b16 %v262
    %v1095 = vunpack.c.h.b16 %v262
    %v1096 = vunpack.c.l.b16 %v263
    %v1097 = vunpack.c.h.b16 %v263
    %v1098 = vunpack.c.l.b16 %v264
    %v1099 = vunpack.c.h.b16 %v264
    %v1100 = vunpack.c.l.b16 %v265
    %v1101 = vunpack.c.h.b16 %v265
    %v1102 = vunpack.c.l.b16 %v266
    %v1103 = vunpack.c.h.b16 %v266
    %v1104 = vunpack.c.l.b16 %v267
    %v1105 = vunpack.c.h.b16 %v267
    %v1106 = vunpack.c.l.b16 %v268
    %v1107 = vunpack.c.h.b16 %v268
    %v1108 = vunpack.c.l.b16 %v269
    %v1109 = vunpack.c.h.b16 %v269
    %v1110 = vunpack.c.l.b16 %v270
    %v1111 = vunpack.c.h.b16 %v270
    %v1112 = vunpack.c.l.b16 %v271
    %v1113 = vunpack.c.h.b16 %v271
    %v1114 = vunpack.c.l.b16 %v272
    %v1115 = vunpack.c.h.b16 %v272
    %v1116 = vunpack.c.l.b16 %v273
    %v1117 = vunpack.c.h.b16 %v273
    %v1118 = vunpack.c.l.b16 %v274
    %v1119 = vunpack.c.h.b16 %v274
    %v1120 = vunpack.c.l.b16 %v275
    %v1121 = vunpack.c.h.b16 %v275
    %v1122 = vunpack.c.l.b16 %v276
    %v1123 = vunpack.c.h.b16 %v276
    %v1124 = vunpack.c.l.b16 %v277
    %v1125 = vunpack.c.h.b16 %v277
    %v1126 = vunpack.c.l.b16 %v278
    %v1127 = vunpack.c.h.b16 %v278
    %v1128 = vunpack.c.l.b16 %v279
    %v1129 = vunpack.c.h.b16 %v279
    %v1130 = vunpack.c.l.b16 %v280
    %v1131 = vunpack.c.h.b16 %v280
    %v1132 = vunpack.c.l.b16 %v281
    %v1133 = vunpack.c.h.b16 %v281
    %v1134 = vunpack.c.l.b16 %v282
    %v1135 = vunpack.c.h.b16 %v282
    %v1136 = vunpack.c.l.b16 %v283
    %v1137 = vunpack.c.h.b16 %v283
    %v1138 = vunpack.c.l.b16 %v284
    %v1139 = vunpack.c.h.b16 %v284
    %v1140 = vunpack.c.l.b16 %v285
    %v1141 = vunpack.c.h.b16 %v285
    %v1142 = vunpack.c.l.b16 %v286
    %v1143 = vunpack.c.h.b16 %v286
    %v1144 = vunpack.c.l.b16 %v287
    %v1145 = vunpack.c.h.b16 %v287
    %v1146 = vunpack.c.l.b16 %v288
    %v1147 = vunpack.c.h.b16 %v288
    %v1148 = vunpack.c.l.b16 %v289
    %v1149 = vunpack.c.h.b16 %v289
    %v1150 = vunpack.c.l.b16 %v290
    %v1151 = vunpack.c.h.b16 %v290
    %v1152 = vunpack.c.l.b16 %v291
    %v1153 = vunpack.c.h.b16 %v291
    %v1154 = vunpack.c.l.b16 %v292
    %v1155 = vunpack.c.h.b16 %v292
    %v1156 = vunpack.c.l.b16 %v293
    %v1157 = vunpack.c.h.b16 %v293
    %v1158 = vunpack.c.l.b16 %v294
    %v1159 = vunpack.c.h.b16 %v294
    %v1160 = vunpack.c.l.b16 %v295
    %v1161 = vunpack.c.h.b16 %v295
    %v1162 = vunpack.c.l.b16 %v296
    %v1163 = vunpack.c.h.b16 %v296
    %v1164 = vunpack.c.l.b16 %v297
    %v1165 = vunpack.c.h.b16 %v297
    %v1166 = vunpack.c.l.b16 %v298
    %v1167 = vunpack.c.h.b16 %v298
    %v1168 = vunpack.c.l.b16 %v299
    %v1169 = vunpack.c.h.b16 %v299
    %v1170 = vunpack.c.l.b16 %v300
    %v1171 = vunpack.c.h.b16 %v300
    %v1172 = vunpack.c.l.b16 %v301
    %v1173 = vunpack.c.h.b16 %v301
    %v1174 = vunpack.c.l.b16 %v302
    %v1175 = vunpack.c.h.b16 %v302
    %v1176 = vunpack.c.l.b16 %v303
    %v1177 = vunpack.c.h.b16 %v303
    %v1178 = vunpack.c.l.b16 %v304
    %v1179 = vunpack.c.h.b16 %v304
    %v1180 = vunpack.c.l.b16 %v305
    %v1181 = vunpack.c.h.b16 %v305
    %v1182 = vunpack.c.l.b16 %v306
    %v1183 = vunpack.c.h.b16 %v306
    %v1184 = vunpack.c.l.b16 %v307
    %v1185 = vunpack.c.h.b16 %v307
    %v1186 = vunpack.c.l.b16 %v308
    %v1187 = vunpack.c.h.b16 %v308
    %v1188 = vunpack.c.l.b16 %v309
    %v1189 = vunpack.c.h.b16 %v309
    %v1190 = vunpack.c.l.b16 %v310
    %v1191 = vunpack.c.h.b16 %v310
    %v1192 = vunpack.c.l.b16 %v311
    %v1193 = vunpack.c.h.b16 %v311
    %v1194 = vunpack.c.l.b16 %v312
    %v1195 = vunpack.c.h.b16 %v312
    %v1196 = vunpack.c.l.b16 %v313
    %v1197 = vunpack.c.h.b16 %v313
    %v1198 = vunpack.c.l.b16 %v314
    %v1199 = vunpack.c.h.b16 %v314
    %v1200 = vunpack.c.l.b16 %v315
    %v1201 = vunpack.c.h.b16 %v315
    %v1202 = vunpack.c.l.b16 %v316
    %v1203 = vunpack.c.h.b16 %v316
    %v1204 = vunpack.c.l.b16 %v317
    %v1205 = vunpack.c.h.b16 %v317
    %v1206 = vunpack.c.l.b16 %v318
    %v1207 = vunpack.c.h.b16 %v318
    %v1208 = vunpack.c.l.b16 %v319
    %v1209 = vunpack.c.h.b16 %v319
    %v1210 = vunpack.c.l.b16 %v320
    %v1211 = vunpack.c.h.b16 %v320
    %v1212 = vunpack.c.l.b16 %v321
    %v1213 = vunpack.c.h.b16 %v321
    %v1214 = vunpack.c.l.b16 %v322
    %v1215 = vunpack.c.h.b16 %v322
    %v1216 = vunpack.c.l.b16 %v323
    %v1217 = vunpack.c.h.b16 %v323
    %v1218 = vunpack.c.l.b16 %v324
    %v1219 = vunpack.c.h.b16 %v324
    %v1220 = vunpack.c.l.b16 %v325
    %v1221 = vunpack.c.h.b16 %v325
    %v1222 = vunpack.c.l.b16 %v326
    %v1223 = vunpack.c.h.b16 %v326
    %v1224 = vunpack.c.l.b16 %v327
    %v1225 = vunpack.c.h.b16 %v327
    %v1226 = vunpack.c.l.b16 %v328
    %v1227 = vunpack.c.h.b16 %v328
    %v1228 = vpack.c.b16 %v658, %v652
    %v1229 = vpack.c.b16 %v659, %v653
    %v1230 = vpack.c.b16 %v660, %v654
    %v1231 = vpack.c.b16 %v661, %v655
    %v1232 = vpack.c.b16 %v662, %v656
    %v1233 = vpack.c.b16 %v663, %v657
    %v1234 = vpack.c.b16 %v670, %v664
    %v1235 = vpack.c.b16 %v671, %v665
    %v1236 = vpack.c.b16 %v672, %v666
    %v1237 = vpack.c.b16 %v673, %v667
    %v1238 = vpack.c.b16 %v674, %v668
    %v1239 = vpack.c.b16 %v675, %v669
    %v1240 = vpack.c.b16 %v682, %v676
    %v1241 = vpack.c.b16 %v683, %v677
    %v1242 = vpack.c.b16 %v684, %v678
    %v1243 = vpack.c.b16 %v685, %v679
    %v1244 = vpack.c.b16 %v686, %v680
    %v1245 = vpack.c.b16 %v687, %v681
    %v1246 = vpack.c.b16 %v694, %v688
    %v1247 = vpack.c.b16 %v695, %v689
    %v1248 = vpack.c.b16 %v696, %v690
    %v1249 = vpack.c.b16 %v697, %v691
    %v1250 = vpack.c.b16 %v698, %v692
    %v1251 = vpack.c.b16 %v699, %v693
    %v1252 = vpack.c.b16 %v706, %v700
    %v1253 = vpack.c.b16 %v707, %v701
    %v1254 = vpack.c.b16 %v708, %v702
    %v1255 = vpack.c.b16 %v709, %v703
    %v1256 = vpack.c.b16 %v710, %v704
    %v1257 = vpack.c.b16 %v711, %v705
    %v1258 = vpack.c.b16 %v718, %v712
    %v1259 = vpack.c.b16 %v719, %v713
    %v1260 = vpack.c.b16 %v720, %v714
    %v1261 = vpack.c.b16 %v721, %v715
    %v1262 = vpack.c.b16 %v722, %v716
    %v1263 = vpack.c.b16 %v723, %v717
    %v1264 = vpack.c.b16 %v730, %v724
    %v1265 = vpack.c.b16 %v731, %v725
    %v1266 = vpack.c.b16 %v732, %v726
    %v1267 = vpack.c.b16 %v733, %v727
    %v1268 = vpack.c.b16 %v734, %v728
    %v1269 = vpack.c.b16 %v735, %v729
    %v1270 = vpack.c.b16 %v742, %v736
    %v1271 = vpack.c.b16 %v743, %v737
    %v1272 = vpack.c.b16 %v744, %v738
    %v1273 = vpack.c.b16 %v745, %v739
    %v1274 = vpack.c.b16 %v746, %v740
    %v1275 = vpack.c.b16 %v747, %v741
    %v1276 = vpack.c.b16 %v754, %v748
    %v1277 = vpack.c.b16 %v755, %v749
    %v1278 = vpack.c.b16 %v756, %v750
    %v1279 = vpack.c.b16 %v757, %v751
    %v1280 = vpack.c.b16 %v758, %v752
    %v1281 = vpack.c.b16 %v759, %v753
    %v1282 = vpack.c.b16 %v766, %v760
    %v1283 = vpack.c.b16 %v767, %v761
    %v1284 = vpack.c.b16 %v768, %v762
    %v1285 = vpack.c.b16 %v769, %v763
    %v1286 = vpack.c.b16 %v770, %v764
    %v1287 = vpack.c.b16 %v771, %v765
    %v1288 = vpack.c.b16 %v778, %v772
    %v1289 = vpack.c.b16 %v779, %v773
    %v1290 = vpack.c.b16 %v780, %v774
    %v1291 = vpack.c.b16 %v781, %v775
    %v1292 = vpack.c.b16 %v782, %v776
    %v1293 = vpack.c.b16 %v783, %v777
    %v1294 = vpack.c.b16 %v790, %v784
    %v1295 = vpack.c.b16 %v791, %v785
    %v1296 = vpack.c.b16 %v792, %v786
    %v1297 = vpack.c.b16 %v793, %v787
    %v1298 = vpack.c.b16 %v794, %v788
    %v1299 = vpack.c.b16 %v795, %v789
    %v1300 = vpack.c.b16 %v802, %v796
    %v1301 = vpack.c.b16 %v803, %v797
    %v1302 = vpack.c.b16 %v804, %v798
    %v1303 = vpack.c.b16 %v805, %v799
    %v1304 = vpack.c.b16 %v806, %v800
    %v1305 = vpack.c.b16 %v807, %v801
    %v1306 = vpack.c.b16 %v814, %v808
    %v1307 = vpack.c.b16 %v815, %v809
    %v1308 = vpack.c.b16 %v816, %v810
    %v1309 = vpack.c.b16 %v817, %v811
    %v1310 = vpack.c.b16 %v818, %v812
    %v1311 = vpack.c.b16 %v819, %v813
    %v1312 = vpack.c.b16 %v826, %v820
    %v1313 = vpack.c.b16 %v827, %v821
    %v1314 = vpack.c.b16 %v828, %v822
    %v1315 = vpack.c.b16 %v829, %v823
    %v1316 = vpack.c.b16 %v830, %v824
    %v1317 = vpack.c.b16 %v831, %v825
    %v1318 = vpack.c.b16 %v838, %v832
    %v1319 = vpack.c.b16 %v839, %v833
    %v1320 = vpack.c.b16 %v840, %v834
    %v1321 = vpack.c.b16 %v841, %v835
    %v1322 = vpack.c.b16 %v842, %v836
    %v1323 = vpack.c.b16 %v843, %v837
    %v1324 = vpack.c.b16 %v850, %v844
    %v1325 = vpack.c.b16 %v851, %v845
    %v1326 = vpack.c.b16 %v852, %v846
    %v1327 = vpack.c.b16 %v853, %v847
    %v1328 = vpack.c.b16 %v854, %v848
    %v1329 = vpack.c.b16 %v855, %v849
    %v1330 = vpack.c.b16 %v862, %v856
    %v1331 = vpack.c.b16 %v863, %v857
    %v1332 = vpack.c.b16 %v864, %v858
    %v1333 = vpack.c.b16 %v865, %v859
    %v1334 = vpack.c.b16 %v866, %v860
    %v1335 = vpack.c.b16 %v867, %v861
    %v1336 = vpack.c.b16 %v874, %v868
    %v1337 = vpack.c.b16 %v875, %v869
    %v1338 = vpack.c.b16 %v876, %v870
    %v1339 = vpack.c.b16 %v877, %v871
    %v1340 = vpack.c.b16 %v878, %v872
    %v1341 = vpack.c.b16 %v879, %v873
    %v1342 = vpack.c.b16 %v886, %v880
    %v1343 = vpack.c.b16 %v887, %v881
    %v1344 = vpack.c.b16 %v888, %v882
    %v1345 = vpack.c.b16 %v889, %v883
    %v1346 = vpack.c.b16 %v890, %v884
    %v1347 = vpack.c.b16 %v891, %v885
    %v1348 = vpack.c.b16 %v898, %v892
    %v1349 = vpack.c.b16 %v899, %v893
    %v1350 = vpack.c.b16 %v900, %v894
    %v1351 = vpack.c.b16 %v901, %v895
    %v1352 = vpack.c.b16 %v902, %v896
    %v1353 = vpack.c.b16 %v903, %v897
    %v1354 = vpack.c.b16 %v910, %v904
    %v1355 = vpack.c.b16 %v911, %v905
    %v1356 = vpack.c.b16 %v912, %v906
    %v1357 = vpack.c.b16 %v913, %v907
    %v1358 = vpack.c.b16 %v914, %v908
    %v1359 = vpack.c.b16 %v915, %v909
    %v1360 = vpack.c.b16 %v922, %v916
    %v1361 = vpack.c.b16 %v923, %v917
    %v1362 = vpack.c.b16 %v924, %v918
    %v1363 = vpack.c.b16 %v925, %v919
    %v1364 = vpack.c.b16 %v926, %v920
    %v1365 = vpack.c.b16 %v927, %v921
    %v1366 = vpack.c.b16 %v934, %v928
    %v1367 = vpack.c.b16 %v935, %v929
    %v1368 = vpack.c.b16 %v936, %v930
    %v1369 = vpack.c.b16 %v937, %v931
    %v1370 = vpack.c.b16 %v938, %v932
    %v1371 = vpack.c.b16 %v939, %v933
    %v1372 = vpack.c.b16 %v946, %v940
    %v1373 = vpack.c.b16 %v947, %v941
    %v1374 = vpack.c.b16 %v948, %v942
    %v1375 = vpack.c.b16 %v949, %v943
    %v1376 = vpack.c.b16 %v950, %v944
    %v1377 = vpack.c.b16 %v951, %v945
    %v1378 = vpack.c.b16 %v958, %v952
    %v1379 = vpack.c.b16 %v959, %v953
    %v1380 = vpack.c.b16 %v960, %v954
    %v1381 = vpack.c.b16 %v961, %v955
    %v1382 = vpack.c.b16 %v962, %v956
    %v1383 = vpack.c.b16 %v963, %v957
    %v1384 = vpack.c.b16 %v970, %v964
    %v1385 = vpack.c.b16 %v971, %v965
    %v1386 = vpack.c.b16 %v972, %v966
    %v1387 = vpack.c.b16 %v973, %v967
    %v1388 = vpack.c.b16 %v974, %v968
    %v1389 = vpack.c.b16 %v975, %v969
    %v1390 = vpack.c.b16 %v982, %v976
    %v1391 = vpack.c.b16 %v983, %v977
    %v1392 = vpack.c.b16 %v984, %v978
    %v1393 = vpack.c.b16 %v985, %v979
    %v1394 = vpack.c.b16 %v986, %v980
    %v1395 = vpack.c.b16 %v987, %v981
    %v1396 = vpack.c.b16 %v994, %v988
    %v1397 = vpack.c.b16 %v995, %v989
    %v1398 = vpack.c.b16 %v996, %v990
    %v1399 = vpack.c.b16 %v997, %v991
    %v1400 = vpack.c.b16 %v998, %v992
    %v1401 = vpack.c.b16 %v999, %v993
    %v1402 = vpack.c.b16 %v1006, %v1000
    %v1403 = vpack.c.b16 %v1007, %v1001
    %v1404 = vpack.c.b16 %v1008, %v1002
    %v1405 = vpack.c.b16 %v1009, %v1003
    %v1406 = vpack.c.b16 %v1010, %v1004
    %v1407 = vpack.c.b16 %v1011, %v1005
    %v1408 = vpack.c.b16 %v1018, %v1012
    %v1409 = vpack.c.b16 %v1019, %v1013
    %v1410 = vpack.c.b16 %v1020, %v1014
    %v1411 = vpack.c.b16 %v1021, %v1015
    %v1412 = vpack.c.b16 %v1022, %v1016
    %v1413 = vpack.c.b16 %v1023, %v1017
    %v1414 = vpack.c.b16 %v1030, %v1024
    %v1415 = vpack.c.b16 %v1031, %v1025
    %v1416 = vpack.c.b16 %v1032, %v1026
    %v1417 = vpack.c.b16 %v1033, %v1027
    %v1418 = vpack.c.b16 %v1034, %v1028
    %v1419 = vpack.c.b16 %v1035, %v1029
    %v1420 = vpack.c.b16 %v1042, %v1036
    %v1421 = vpack.c.b16 %v1043, %v1037
    %v1422 = vpack.c.b16 %v1044, %v1038
    %v1423 = vpack.c.b16 %v1045, %v1039
    %v1424 = vpack.c.b16 %v1046, %v1040
    %v1425 = vpack.c.b16 %v1047, %v1041
    %v1426 = vpack.c.b16 %v1054, %v1048
    %v1427 = vpack.c.b16 %v1055, %v1049
    %v1428 = vpack.c.b16 %v1056, %v1050
    %v1429 = vpack.c.b16 %v1057, %v1051
    %v1430 = vpack.c.b16 %v1058, %v1052
    %v1431 = vpack.c.b16 %v1059, %v1053
    %v1432 = vpack.c.b16 %v1066, %v1060
    %v1433 = vpack.c.b16 %v1067, %v1061
    %v1434 = vpack.c.b16 %v1068, %v1062
    %v1435 = vpack.c.b16 %v1069, %v1063
    %v1436 = vpack.c.b16 %v1070, %v1064
    %v1437 = vpack.c.b16 %v1071, %v1065
    %v1438 = vpack.c.b16 %v1078, %v1072
    %v1439 = vpack.c.b16 %v1079, %v1073
    %v1440 = vpack.c.b16 %v1080, %v1074
    %v1441 = vpack.c.b16 %v1081, %v1075
    %v1442 = vpack.c.b16 %v1082, %v1076
    %v1443 = vpack.c.b16 %v1083, %v1077
    %v1444 = vpack.c.b16 %v1090, %v1084
    %v1445 = vpack.c.b16 %v1091, %v1085
    %v1446 = vpack.c.b16 %v1092, %v1086
    %v1447 = vpack.c.b16 %v1093, %v1087
    %v1448 = vpack.c.b16 %v1094, %v1088
    %v1449 = vpack.c.b16 %v1095, %v1089
    %v1450 = vpack.c.b16 %v1102, %v1096
    %v1451 = vpack.c.b16 %v1103, %v1097
    %v1452 = vpack.c.b16 %v1104, %v1098
    %v1453 = vpack.c.b16 %v1105, %v1099
    %v1454 = vpack.c.b16 %v1106, %v1100
    %v1455 = vpack.c.b16 %v1107, %v1101
    %v1456 = vpack.c.b16 %v1114, %v1108
    %v1457 = vpack.c.b16 %v1115, %v1109
    %v1458 = vpack.c.b16 %v1116, %v1110
    %v1459 = vpack.c.b16 %v1117, %v1111
    %v1460 = vpack.c.b16 %v1118, %v1112
    %v1461 = vpack.c.b16 %v1119, %v1113
    %v1462 = vpack.c.b16 %v1126, %v1120
    %v1463 = vpack.c.b16 %v1127, %v1121
    %v1464 = vpack.c.b16 %v1128, %v1122
    %v1465 = vpack.c.b16 %v1129, %v1123
    %v1466 = vpack.c.b16 %v1130, %v1124
    %v1467 = vpack.c.b16 %v1131, %v1125
    %v1468 = vpack.c.b16 %v1138, %v1132
    %v1469 = vpack.c.b16 %v1139, %v1133
    %v1470 = vpack.c.b16 %v1140, %v1134
    %v1471 = vpack.c.b16 %v1141, %v1135
    %v1472 = vpack.c.b16 %v1142, %v1136
    %v1473 = vpack.c.b16 %v1143, %v1137
    %v1474 = vpack.c.b16 %v1150, %v1144
    %v1475 = vpack.c.b16 %v1151, %v1145
    %v1476 = vpack.c.b16 %v1152, %v1146
    %v1477 = vpack.c.b16 %v1153, %v1147
    %v1478 = vpack.c.b16 %v1154, %v1148
    %v1479 = vpack.c.b16 %v1155, %v1149
    %v1480 = vpack.c.b16 %v1162, %v1156
    %v1481 = vpack.c.b16 %v1163, %v1157
    %v1482 = vpack.c.b16 %v1164, %v1158
    %v1483 = vpack.c.b16 %v1165, %v1159
    %v1484 = vpack.c.b16 %v1166, %v1160
    %v1485 = vpack.c.b16 %v1167, %v1161
    %v1486 = vpack.c.b16 %v1174, %v1168
    %v1487 = vpack.c.b16 %v1175, %v1169
    %v1488 = vpack.c.b16 %v1176, %v1170
    %v1489 = vpack.c.b16 %v1177, %v1171
    %v1490 = vpack.c.b16 %v1178, %v1172
    %v1491 = vpack.c.b16 %v1179, %v1173
    %v1492 = vpack.c.b16 %v1186, %v1180
    %v1493 = vpack.c.b16 %v1187, %v1181
    %v1494 = vpack.c.b16 %v1188, %v1182
    %v1495 = vpack.c.b16 %v1189, %v1183
    %v1496 = vpack.c.b16 %v1190, %v1184
    %v1497 = vpack.c.b16 %v1191, %v1185
    %v1498 = vpack.c.b16 %v1198, %v1192
    %v1499 = vpack.c.b16 %v1199, %v1193
    %v1500 = vpack.c.b16 %v1200, %v1194
    %v1501 = vpack.c.b16 %v1201, %v1195
    %v1502 = vpack.c.b16 %v1202, %v1196
    %v1503 = vpack.c.b16 %v1203, %v1197
    %v1504 = vpack.c.b16 %v1210, %v1204
    %v1505 = vpack.c.b16 %v1211, %v1205
    %v1506 = vpack.c.b16 %v1212, %v1206
    %v1507 = vpack.c.b16 %v1213, %v1207
    %v1508 = vpack.c.b16 %v1214, %v1208
    %v1509 = vpack.c.b16 %v1215, %v1209
    %v1510 = vpack.c.b16 %v1222, %v1216
    %v1511 = vpack.c.b16 %v1223, %v1217
    %v1512 = vpack.c.b16 %v1224, %v1218
    %v1513 = vpack.c.b16 %v1225, %v1219
    %v1514 = vpack.c.b16 %v1226, %v1220
    %v1515 = vpack.c.b16 %v1227, %v1221
    %1804 = vmatpush.bf16.msra.mxu0 %v1270
    %1805 = vmatpush.bf16.msra.mxu0 %v1264
    %1806 = vmatpush.bf16.msra.mxu0 %v1258
    %1807 = vmatpush.bf16.msra.mxu0 %v1252
    %1808 = vmatpush.bf16.msra.mxu0 %v1246
    %1809 = vmatpush.bf16.msra.mxu0 %v1240
    %1810 = vmatpush.bf16.msra.mxu0 %v1234
    %1811 = vmatpush.bf16.msra.mxu0 %v1228
    %1812 = vmatmul.bf16.gmra.mxu0 %v352
    %v1813 = vpop.f32.mrf.mxu0
    %v1814 = vadd.f32 %v331, %v1813
    %v1815 = vpop.f32.mrf.mxu0
    %1816 = vdwg.mxu0
    %1817 = vmatpush.bf16.msra.mxu0 %v1318
    %1818 = vmatpush.bf16.msra.mxu0 %v1312
    %1819 = vmatpush.bf16.msra.mxu0 %v1306
    %1820 = vmatpush.bf16.msra.mxu0 %v1300
    %1821 = vmatpush.bf16.msra.mxu0 %v1294
    %1822 = vmatpush.bf16.msra.mxu0 %v1288
    %1823 = vmatpush.bf16.msra.mxu0 %v1282
    %1824 = vmatpush.bf16.msra.mxu0 %v1276
    %1825 = vmatmul.bf16.gmra.mxu0 %v353
    %v1826 = vpop.f32.mrf.mxu0
    %v1827 = vadd.f32 %v1814, %v1826
    %v1828 = vpop.f32.mrf.mxu0
    %1829 = vdwg.mxu0
    %1830 = vmatpush.bf16.msra.mxu0 %v1366
    %1831 = vmatpush.bf16.msra.mxu0 %v1360
    %1832 = vmatpush.bf16.msra.mxu0 %v1354
    %1833 = vmatpush.bf16.msra.mxu0 %v1348
    %1834 = vmatpush.bf16.msra.mxu0 %v1342
    %1835 = vmatpush.bf16.msra.mxu0 %v1336
    %1836 = vmatpush.bf16.msra.mxu0 %v1330
    %1837 = vmatpush.bf16.msra.mxu0 %v1324
    %1838 = vmatmul.bf16.gmra.mxu0 %v354
    %v1839 = vpop.f32.mrf.mxu0
    %v1840 = vadd.f32 %v1827, %v1839
    %v1841 = vpop.f32.mrf.mxu0
    %1842 = vdwg.mxu0
    %1843 = vmatpush.bf16.msra.mxu0 %v1414
    %1844 = vmatpush.bf16.msra.mxu0 %v1408
    %1845 = vmatpush.bf16.msra.mxu0 %v1402
    %1846 = vmatpush.bf16.msra.mxu0 %v1396
    %1847 = vmatpush.bf16.msra.mxu0 %v1390
    %1848 = vmatpush.bf16.msra.mxu0 %v1384
    %1849 = vmatpush.bf16.msra.mxu0 %v1378
    %1850 = vmatpush.bf16.msra.mxu0 %v1372
    %1851 = vmatmul.bf16.gmra.mxu0 %v355
    %v1852 = vpop.f32.mrf.mxu0
    %v1853 = vadd.f32 %v1840, %v1852
    %v1854 = vpop.f32.mrf.mxu0
    %1855 = vdwg.mxu0
    %1856 = vmatpush.bf16.msra.mxu0 %v1462
    %1857 = vmatpush.bf16.msra.mxu0 %v1456
    %1858 = vmatpush.bf16.msra.mxu0 %v1450
    %1859 = vmatpush.bf16.msra.mxu0 %v1444
    %1860 = vmatpush.bf16.msra.mxu0 %v1438
    %1861 = vmatpush.bf16.msra.mxu0 %v1432
    %1862 = vmatpush.bf16.msra.mxu0 %v1426
    %1863 = vmatpush.bf16.msra.mxu0 %v1420
    %1864 = vmatmul.bf16.gmra.mxu0 %v356
    %v1865 = vpop.f32.mrf.mxu0
    %v1866 = vadd.f32 %v1853, %v1865
    %v1867 = vpop.f32.mrf.mxu0
    %1868 = vdwg.mxu0
    %1869 = vmatpush.bf16.msra.mxu0 %v1510
    %1870 = vmatpush.bf16.msra.mxu0 %v1504
    %1871 = vmatpush.bf16.msra.mxu0 %v1498
    %1872 = vmatpush.bf16.msra.mxu0 %v1492
    %1873 = vmatpush.bf16.msra.mxu0 %v1486
    %1874 = vmatpush.bf16.msra.mxu0 %v1480
    %1875 = vmatpush.bf16.msra.mxu0 %v1474
    %1876 = vmatpush.bf16.msra.mxu0 %v1468
    %1877 = vmatmul.bf16.gmra.mxu0 %v357
    %v1878 = vpop.f32.mrf.mxu0
    %v1879 = vadd.f32 %v1866, %v1878
    %v1880 = vpop.f32.mrf.mxu0
    %1881 = vdwg.mxu0
    %1882 = vmatpush.bf16.msra.mxu0 %v1271
    %1883 = vmatpush.bf16.msra.mxu0 %v1265
    %1884 = vmatpush.bf16.msra.mxu0 %v1259
    %1885 = vmatpush.bf16.msra.mxu0 %v1253
    %1886 = vmatpush.bf16.msra.mxu0 %v1247
    %1887 = vmatpush.bf16.msra.mxu0 %v1241
    %1888 = vmatpush.bf16.msra.mxu0 %v1235
    %1889 = vmatpush.bf16.msra.mxu0 %v1229
    %1890 = vmatmul.bf16.gmra.mxu0 %v352
    %v1891 = vpop.f32.mrf.mxu0
    %v1892 = vadd.f32 %v332, %v1891
    %v1893 = vpop.f32.mrf.mxu0
    %1894 = vdwg.mxu0
    %1895 = vmatpush.bf16.msra.mxu0 %v1319
    %1896 = vmatpush.bf16.msra.mxu0 %v1313
    %1897 = vmatpush.bf16.msra.mxu0 %v1307
    %1898 = vmatpush.bf16.msra.mxu0 %v1301
    %1899 = vmatpush.bf16.msra.mxu0 %v1295
    %1900 = vmatpush.bf16.msra.mxu0 %v1289
    %1901 = vmatpush.bf16.msra.mxu0 %v1283
    %1902 = vmatpush.bf16.msra.mxu0 %v1277
    %1903 = vmatmul.bf16.gmra.mxu0 %v353
    %v1904 = vpop.f32.mrf.mxu0
    %v1905 = vadd.f32 %v1892, %v1904
    %v1906 = vpop.f32.mrf.mxu0
    %1907 = vdwg.mxu0
    %1908 = vmatpush.bf16.msra.mxu0 %v1367
    %1909 = vmatpush.bf16.msra.mxu0 %v1361
    %1910 = vmatpush.bf16.msra.mxu0 %v1355
    %1911 = vmatpush.bf16.msra.mxu0 %v1349
    %1912 = vmatpush.bf16.msra.mxu0 %v1343
    %1913 = vmatpush.bf16.msra.mxu0 %v1337
    %1914 = vmatpush.bf16.msra.mxu0 %v1331
    %1915 = vmatpush.bf16.msra.mxu0 %v1325
    %1916 = vmatmul.bf16.gmra.mxu0 %v354
    %v1917 = vpop.f32.mrf.mxu0
    %v1918 = vadd.f32 %v1905, %v1917
    %v1919 = vpop.f32.mrf.mxu0
    %1920 = vdwg.mxu0
    %1921 = vmatpush.bf16.msra.mxu0 %v1415
    %1922 = vmatpush.bf16.msra.mxu0 %v1409
    %1923 = vmatpush.bf16.msra.mxu0 %v1403
    %1924 = vmatpush.bf16.msra.mxu0 %v1397
    %1925 = vmatpush.bf16.msra.mxu0 %v1391
    %1926 = vmatpush.bf16.msra.mxu0 %v1385
    %1927 = vmatpush.bf16.msra.mxu0 %v1379
    %1928 = vmatpush.bf16.msra.mxu0 %v1373
    %1929 = vmatmul.bf16.gmra.mxu0 %v355
    %v1930 = vpop.f32.mrf.mxu0
    %v1931 = vadd.f32 %v1918, %v1930
    %v1932 = vpop.f32.mrf.mxu0
    %1933 = vdwg.mxu0
    %1934 = vmatpush.bf16.msra.mxu0 %v1463
    %1935 = vmatpush.bf16.msra.mxu0 %v1457
    %1936 = vmatpush.bf16.msra.mxu0 %v1451
    %1937 = vmatpush.bf16.msra.mxu0 %v1445
    %1938 = vmatpush.bf16.msra.mxu0 %v1439
    %1939 = vmatpush.bf16.msra.mxu0 %v1433
    %1940 = vmatpush.bf16.msra.mxu0 %v1427
    %1941 = vmatpush.bf16.msra.mxu0 %v1421
    %1942 = vmatmul.bf16.gmra.mxu0 %v356
    %v1943 = vpop.f32.mrf.mxu0
    %v1944 = vadd.f32 %v1931, %v1943
    %v1945 = vpop.f32.mrf.mxu0
    %1946 = vdwg.mxu0
    %1947 = vmatpush.bf16.msra.mxu0 %v1511
    %1948 = vmatpush.bf16.msra.mxu0 %v1505
    %1949 = vmatpush.bf16.msra.mxu0 %v1499
    %1950 = vmatpush.bf16.msra.mxu0 %v1493
    %1951 = vmatpush.bf16.msra.mxu0 %v1487
    %1952 = vmatpush.bf16.msra.mxu0 %v1481
    %1953 = vmatpush.bf16.msra.mxu0 %v1475
    %1954 = vmatpush.bf16.msra.mxu0 %v1469
    %1955 = vmatmul.bf16.gmra.mxu0 %v357
    %v1956 = vpop.f32.mrf.mxu0
    %v1957 = vadd.f32 %v1944, %v1956
    %v1958 = vpop.f32.mrf.mxu0
    %1959 = vdwg.mxu0
    %1960 = vmatpush.bf16.msra.mxu0 %v1272
    %1961 = vmatpush.bf16.msra.mxu0 %v1266
    %1962 = vmatpush.bf16.msra.mxu0 %v1260
    %1963 = vmatpush.bf16.msra.mxu0 %v1254
    %1964 = vmatpush.bf16.msra.mxu0 %v1248
    %1965 = vmatpush.bf16.msra.mxu0 %v1242
    %1966 = vmatpush.bf16.msra.mxu0 %v1236
    %1967 = vmatpush.bf16.msra.mxu0 %v1230
    %1968 = vmatmul.bf16.gmra.mxu0 %v352
    %v1969 = vpop.f32.mrf.mxu0
    %v1970 = vadd.f32 %v333, %v1969
    %v1971 = vpop.f32.mrf.mxu0
    %1972 = vdwg.mxu0
    %1973 = vmatpush.bf16.msra.mxu0 %v1320
    %1974 = vmatpush.bf16.msra.mxu0 %v1314
    %1975 = vmatpush.bf16.msra.mxu0 %v1308
    %1976 = vmatpush.bf16.msra.mxu0 %v1302
    %1977 = vmatpush.bf16.msra.mxu0 %v1296
    %1978 = vmatpush.bf16.msra.mxu0 %v1290
    %1979 = vmatpush.bf16.msra.mxu0 %v1284
    %1980 = vmatpush.bf16.msra.mxu0 %v1278
    %1981 = vmatmul.bf16.gmra.mxu0 %v353
    %v1982 = vpop.f32.mrf.mxu0
    %v1983 = vadd.f32 %v1970, %v1982
    %v1984 = vpop.f32.mrf.mxu0
    %1985 = vdwg.mxu0
    %1986 = vmatpush.bf16.msra.mxu0 %v1368
    %1987 = vmatpush.bf16.msra.mxu0 %v1362
    %1988 = vmatpush.bf16.msra.mxu0 %v1356
    %1989 = vmatpush.bf16.msra.mxu0 %v1350
    %1990 = vmatpush.bf16.msra.mxu0 %v1344
    %1991 = vmatpush.bf16.msra.mxu0 %v1338
    %1992 = vmatpush.bf16.msra.mxu0 %v1332
    %1993 = vmatpush.bf16.msra.mxu0 %v1326
    %1994 = vmatmul.bf16.gmra.mxu0 %v354
    %v1995 = vpop.f32.mrf.mxu0
    %v1996 = vadd.f32 %v1983, %v1995
    %v1997 = vpop.f32.mrf.mxu0
    %1998 = vdwg.mxu0
    %1999 = vmatpush.bf16.msra.mxu0 %v1416
    %2000 = vmatpush.bf16.msra.mxu0 %v1410
    %2001 = vmatpush.bf16.msra.mxu0 %v1404
    %2002 = vmatpush.bf16.msra.mxu0 %v1398
    %2003 = vmatpush.bf16.msra.mxu0 %v1392
    %2004 = vmatpush.bf16.msra.mxu0 %v1386
    %2005 = vmatpush.bf16.msra.mxu0 %v1380
    %2006 = vmatpush.bf16.msra.mxu0 %v1374
    %2007 = vmatmul.bf16.gmra.mxu0 %v355
    %v2008 = vpop.f32.mrf.mxu0
    %v2009 = vadd.f32 %v1996, %v2008
    %v2010 = vpop.f32.mrf.mxu0
    %2011 = vdwg.mxu0
    %2012 = vmatpush.bf16.msra.mxu0 %v1464
    %2013 = vmatpush.bf16.msra.mxu0 %v1458
    %2014 = vmatpush.bf16.msra.mxu0 %v1452
    %2015 = vmatpush.bf16.msra.mxu0 %v1446
    %2016 = vmatpush.bf16.msra.mxu0 %v1440
    %2017 = vmatpush.bf16.msra.mxu0 %v1434
    %2018 = vmatpush.bf16.msra.mxu0 %v1428
    %2019 = vmatpush.bf16.msra.mxu0 %v1422
    %2020 = vmatmul.bf16.gmra.mxu0 %v356
    %v2021 = vpop.f32.mrf.mxu0
    %v2022 = vadd.f32 %v2009, %v2021
    %v2023 = vpop.f32.mrf.mxu0
    %2024 = vdwg.mxu0
    %2025 = vmatpush.bf16.msra.mxu0 %v1512
    %2026 = vmatpush.bf16.msra.mxu0 %v1506
    %2027 = vmatpush.bf16.msra.mxu0 %v1500
    %2028 = vmatpush.bf16.msra.mxu0 %v1494
    %2029 = vmatpush.bf16.msra.mxu0 %v1488
    %2030 = vmatpush.bf16.msra.mxu0 %v1482
    %2031 = vmatpush.bf16.msra.mxu0 %v1476
    %2032 = vmatpush.bf16.msra.mxu0 %v1470
    %2033 = vmatmul.bf16.gmra.mxu0 %v357
    %v2034 = vpop.f32.mrf.mxu0
    %v2035 = vadd.f32 %v2022, %v2034
    %v2036 = vpop.f32.mrf.mxu0
    %2037 = vdwg.mxu0
    %2038 = vmatpush.bf16.msra.mxu0 %v1273
    %2039 = vmatpush.bf16.msra.mxu0 %v1267
    %2040 = vmatpush.bf16.msra.mxu0 %v1261
    %2041 = vmatpush.bf16.msra.mxu0 %v1255
    %2042 = vmatpush.bf16.msra.mxu0 %v1249
    %2043 = vmatpush.bf16.msra.mxu0 %v1243
    %2044 = vmatpush.bf16.msra.mxu0 %v1237
    %2045 = vmatpush.bf16.msra.mxu0 %v1231
    %2046 = vmatmul.bf16.gmra.mxu0 %v352
    %v2047 = vpop.f32.mrf.mxu0
    %v2048 = vadd.f32 %v334, %v2047
    %v2049 = vpop.f32.mrf.mxu0
    %2050 = vdwg.mxu0
    %2051 = vmatpush.bf16.msra.mxu0 %v1321
    %2052 = vmatpush.bf16.msra.mxu0 %v1315
    %2053 = vmatpush.bf16.msra.mxu0 %v1309
    %2054 = vmatpush.bf16.msra.mxu0 %v1303
    %2055 = vmatpush.bf16.msra.mxu0 %v1297
    %2056 = vmatpush.bf16.msra.mxu0 %v1291
    %2057 = vmatpush.bf16.msra.mxu0 %v1285
    %2058 = vmatpush.bf16.msra.mxu0 %v1279
    %2059 = vmatmul.bf16.gmra.mxu0 %v353
    %v2060 = vpop.f32.mrf.mxu0
    %v2061 = vadd.f32 %v2048, %v2060
    %v2062 = vpop.f32.mrf.mxu0
    %2063 = vdwg.mxu0
    %2064 = vmatpush.bf16.msra.mxu0 %v1369
    %2065 = vmatpush.bf16.msra.mxu0 %v1363
    %2066 = vmatpush.bf16.msra.mxu0 %v1357
    %2067 = vmatpush.bf16.msra.mxu0 %v1351
    %2068 = vmatpush.bf16.msra.mxu0 %v1345
    %2069 = vmatpush.bf16.msra.mxu0 %v1339
    %2070 = vmatpush.bf16.msra.mxu0 %v1333
    %2071 = vmatpush.bf16.msra.mxu0 %v1327
    %2072 = vmatmul.bf16.gmra.mxu0 %v354
    %v2073 = vpop.f32.mrf.mxu0
    %v2074 = vadd.f32 %v2061, %v2073
    %v2075 = vpop.f32.mrf.mxu0
    %2076 = vdwg.mxu0
    %2077 = vmatpush.bf16.msra.mxu0 %v1417
    %2078 = vmatpush.bf16.msra.mxu0 %v1411
    %2079 = vmatpush.bf16.msra.mxu0 %v1405
    %2080 = vmatpush.bf16.msra.mxu0 %v1399
    %2081 = vmatpush.bf16.msra.mxu0 %v1393
    %2082 = vmatpush.bf16.msra.mxu0 %v1387
    %2083 = vmatpush.bf16.msra.mxu0 %v1381
    %2084 = vmatpush.bf16.msra.mxu0 %v1375
    %2085 = vmatmul.bf16.gmra.mxu0 %v355
    %v2086 = vpop.f32.mrf.mxu0
    %v2087 = vadd.f32 %v2074, %v2086
    %v2088 = vpop.f32.mrf.mxu0
    %2089 = vdwg.mxu0
    %2090 = vmatpush.bf16.msra.mxu0 %v1465
    %2091 = vmatpush.bf16.msra.mxu0 %v1459
    %2092 = vmatpush.bf16.msra.mxu0 %v1453
    %2093 = vmatpush.bf16.msra.mxu0 %v1447
    %2094 = vmatpush.bf16.msra.mxu0 %v1441
    %2095 = vmatpush.bf16.msra.mxu0 %v1435
    %2096 = vmatpush.bf16.msra.mxu0 %v1429
    %2097 = vmatpush.bf16.msra.mxu0 %v1423
    %2098 = vmatmul.bf16.gmra.mxu0 %v356
    %v2099 = vpop.f32.mrf.mxu0
    %v2100 = vadd.f32 %v2087, %v2099
    %v2101 = vpop.f32.mrf.mxu0
    %2102 = vdwg.mxu0
    %2103 = vmatpush.bf16.msra.mxu0 %v1513
    %2104 = vmatpush.bf16.msra.mxu0 %v1507
    %2105 = vmatpush.bf16.msra.mxu0 %v1501
    %2106 = vmatpush.bf16.msra.mxu0 %v1495
    %2107 = vmatpush.bf16.msra.mxu0 %v1489
    %2108 = vmatpush.bf16.msra.mxu0 %v1483
    %2109 = vmatpush.bf16.msra.mxu0 %v1477
    %2110 = vmatpush.bf16.msra.mxu0 %v1471
    %2111 = vmatmul.bf16.gmra.mxu0 %v357
    %v2112 = vpop.f32.mrf.mxu0
    %v2113 = vadd.f32 %v2100, %v2112
    %v2114 = vpop.f32.mrf.mxu0
    %2115 = vdwg.mxu0
    %2116 = vmatpush.bf16.msra.mxu0 %v1274
    %2117 = vmatpush.bf16.msra.mxu0 %v1268
    %2118 = vmatpush.bf16.msra.mxu0 %v1262
    %2119 = vmatpush.bf16.msra.mxu0 %v1256
    %2120 = vmatpush.bf16.msra.mxu0 %v1250
    %2121 = vmatpush.bf16.msra.mxu0 %v1244
    %2122 = vmatpush.bf16.msra.mxu0 %v1238
    %2123 = vmatpush.bf16.msra.mxu0 %v1232
    %2124 = vmatmul.bf16.gmra.mxu0 %v352
    %v2125 = vpop.f32.mrf.mxu0
    %v2126 = vadd.f32 %v335, %v2125
    %v2127 = vpop.f32.mrf.mxu0
    %2128 = vdwg.mxu0
    %2129 = vmatpush.bf16.msra.mxu0 %v1322
    %2130 = vmatpush.bf16.msra.mxu0 %v1316
    %2131 = vmatpush.bf16.msra.mxu0 %v1310
    %2132 = vmatpush.bf16.msra.mxu0 %v1304
    %2133 = vmatpush.bf16.msra.mxu0 %v1298
    %2134 = vmatpush.bf16.msra.mxu0 %v1292
    %2135 = vmatpush.bf16.msra.mxu0 %v1286
    %2136 = vmatpush.bf16.msra.mxu0 %v1280
    %2137 = vmatmul.bf16.gmra.mxu0 %v353
    %v2138 = vpop.f32.mrf.mxu0
    %v2139 = vadd.f32 %v2126, %v2138
    %v2140 = vpop.f32.mrf.mxu0
    %2141 = vdwg.mxu0
    %2142 = vmatpush.bf16.msra.mxu0 %v1370
    %2143 = vmatpush.bf16.msra.mxu0 %v1364
    %2144 = vmatpush.bf16.msra.mxu0 %v1358
    %2145 = vmatpush.bf16.msra.mxu0 %v1352
    %2146 = vmatpush.bf16.msra.mxu0 %v1346
    %2147 = vmatpush.bf16.msra.mxu0 %v1340
    %2148 = vmatpush.bf16.msra.mxu0 %v1334
    %2149 = vmatpush.bf16.msra.mxu0 %v1328
    %2150 = vmatmul.bf16.gmra.mxu0 %v354
    %v2151 = vpop.f32.mrf.mxu0
    %v2152 = vadd.f32 %v2139, %v2151
    %v2153 = vpop.f32.mrf.mxu0
    %2154 = vdwg.mxu0
    %2155 = vmatpush.bf16.msra.mxu0 %v1418
    %2156 = vmatpush.bf16.msra.mxu0 %v1412
    %2157 = vmatpush.bf16.msra.mxu0 %v1406
    %2158 = vmatpush.bf16.msra.mxu0 %v1400
    %2159 = vmatpush.bf16.msra.mxu0 %v1394
    %2160 = vmatpush.bf16.msra.mxu0 %v1388
    %2161 = vmatpush.bf16.msra.mxu0 %v1382
    %2162 = vmatpush.bf16.msra.mxu0 %v1376
    %2163 = vmatmul.bf16.gmra.mxu0 %v355
    %v2164 = vpop.f32.mrf.mxu0
    %v2165 = vadd.f32 %v2152, %v2164
    %v2166 = vpop.f32.mrf.mxu0
    %2167 = vdwg.mxu0
    %2168 = vmatpush.bf16.msra.mxu0 %v1466
    %2169 = vmatpush.bf16.msra.mxu0 %v1460
    %2170 = vmatpush.bf16.msra.mxu0 %v1454
    %2171 = vmatpush.bf16.msra.mxu0 %v1448
    %2172 = vmatpush.bf16.msra.mxu0 %v1442
    %2173 = vmatpush.bf16.msra.mxu0 %v1436
    %2174 = vmatpush.bf16.msra.mxu0 %v1430
    %2175 = vmatpush.bf16.msra.mxu0 %v1424
    %2176 = vmatmul.bf16.gmra.mxu0 %v356
    %v2177 = vpop.f32.mrf.mxu0
    %v2178 = vadd.f32 %v2165, %v2177
    %v2179 = vpop.f32.mrf.mxu0
    %2180 = vdwg.mxu0
    %2181 = vmatpush.bf16.msra.mxu0 %v1514
    %2182 = vmatpush.bf16.msra.mxu0 %v1508
    %2183 = vmatpush.bf16.msra.mxu0 %v1502
    %2184 = vmatpush.bf16.msra.mxu0 %v1496
    %2185 = vmatpush.bf16.msra.mxu0 %v1490
    %2186 = vmatpush.bf16.msra.mxu0 %v1484
    %2187 = vmatpush.bf16.msra.mxu0 %v1478
    %2188 = vmatpush.bf16.msra.mxu0 %v1472
    %2189 = vmatmul.bf16.gmra.mxu0 %v357
    %v2190 = vpop.f32.mrf.mxu0
    %v2191 = vadd.f32 %v2178, %v2190
    %v2192 = vpop.f32.mrf.mxu0
    %2193 = vdwg.mxu0
    %2194 = vmatpush.bf16.msra.mxu0 %v1275
    %2195 = vmatpush.bf16.msra.mxu0 %v1269
    %2196 = vmatpush.bf16.msra.mxu0 %v1263
    %2197 = vmatpush.bf16.msra.mxu0 %v1257
    %2198 = vmatpush.bf16.msra.mxu0 %v1251
    %2199 = vmatpush.bf16.msra.mxu0 %v1245
    %2200 = vmatpush.bf16.msra.mxu0 %v1239
    %2201 = vmatpush.bf16.msra.mxu0 %v1233
    %2202 = vmatmul.bf16.gmra.mxu0 %v352
    %v2203 = vpop.f32.mrf.mxu0
    %v2204 = vadd.f32 %v336, %v2203
    %v2205 = vpop.f32.mrf.mxu0
    %2206 = vdwg.mxu0
    %2207 = vmatpush.bf16.msra.mxu0 %v1323
    %2208 = vmatpush.bf16.msra.mxu0 %v1317
    %2209 = vmatpush.bf16.msra.mxu0 %v1311
    %2210 = vmatpush.bf16.msra.mxu0 %v1305
    %2211 = vmatpush.bf16.msra.mxu0 %v1299
    %2212 = vmatpush.bf16.msra.mxu0 %v1293
    %2213 = vmatpush.bf16.msra.mxu0 %v1287
    %2214 = vmatpush.bf16.msra.mxu0 %v1281
    %2215 = vmatmul.bf16.gmra.mxu0 %v353
    %v2216 = vpop.f32.mrf.mxu0
    %v2217 = vadd.f32 %v2204, %v2216
    %v2218 = vpop.f32.mrf.mxu0
    %2219 = vdwg.mxu0
    %2220 = vmatpush.bf16.msra.mxu0 %v1371
    %2221 = vmatpush.bf16.msra.mxu0 %v1365
    %2222 = vmatpush.bf16.msra.mxu0 %v1359
    %2223 = vmatpush.bf16.msra.mxu0 %v1353
    %2224 = vmatpush.bf16.msra.mxu0 %v1347
    %2225 = vmatpush.bf16.msra.mxu0 %v1341
    %2226 = vmatpush.bf16.msra.mxu0 %v1335
    %2227 = vmatpush.bf16.msra.mxu0 %v1329
    %2228 = vmatmul.bf16.gmra.mxu0 %v354
    %v2229 = vpop.f32.mrf.mxu0
    %v2230 = vadd.f32 %v2217, %v2229
    %v2231 = vpop.f32.mrf.mxu0
    %2232 = vdwg.mxu0
    %2233 = vmatpush.bf16.msra.mxu0 %v1419
    %2234 = vmatpush.bf16.msra.mxu0 %v1413
    %2235 = vmatpush.bf16.msra.mxu0 %v1407
    %2236 = vmatpush.bf16.msra.mxu0 %v1401
    %2237 = vmatpush.bf16.msra.mxu0 %v1395
    %2238 = vmatpush.bf16.msra.mxu0 %v1389
    %2239 = vmatpush.bf16.msra.mxu0 %v1383
    %2240 = vmatpush.bf16.msra.mxu0 %v1377
    %2241 = vmatmul.bf16.gmra.mxu0 %v355
    %v2242 = vpop.f32.mrf.mxu0
    %v2243 = vadd.f32 %v2230, %v2242
    %v2244 = vpop.f32.mrf.mxu0
    %2245 = vdwg.mxu0
    %2246 = vmatpush.bf16.msra.mxu0 %v1467
    %2247 = vmatpush.bf16.msra.mxu0 %v1461
    %2248 = vmatpush.bf16.msra.mxu0 %v1455
    %2249 = vmatpush.bf16.msra.mxu0 %v1449
    %2250 = vmatpush.bf16.msra.mxu0 %v1443
    %2251 = vmatpush.bf16.msra.mxu0 %v1437
    %2252 = vmatpush.bf16.msra.mxu0 %v1431
    %2253 = vmatpush.bf16.msra.mxu0 %v1425
    %2254 = vmatmul.bf16.gmra.mxu0 %v356
    %v2255 = vpop.f32.mrf.mxu0
    %v2256 = vadd.f32 %v2243, %v2255
    %v2257 = vpop.f32.mrf.mxu0
    %2258 = vdwg.mxu0
    %2259 = vmatpush.bf16.msra.mxu0 %v1515
    %2260 = vmatpush.bf16.msra.mxu0 %v1509
    %2261 = vmatpush.bf16.msra.mxu0 %v1503
    %2262 = vmatpush.bf16.msra.mxu0 %v1497
    %2263 = vmatpush.bf16.msra.mxu0 %v1491
    %2264 = vmatpush.bf16.msra.mxu0 %v1485
    %2265 = vmatpush.bf16.msra.mxu0 %v1479
    %2266 = vmatpush.bf16.msra.mxu0 %v1473
    %2267 = vmatmul.bf16.gmra.mxu0 %v357
    %v2268 = vpop.f32.mrf.mxu0
    %v2269 = vadd.f32 %v2256, %v2268
    %v2270 = vpop.f32.mrf.mxu0
    %2271 = vdwg.mxu0
    %v2272 = vtanh.pop %v1879
    %v2273 = vtanh.pop %v1957
    %v2274 = vtanh.pop %v2035
    %v2275 = vtanh.pop %v2113
    %v2276 = vtanh.pop %v2191
    %v2277 = vtanh.pop %v2269
    %v2278 = vpack.c.bf16 %v2272, %v2272
    %v2279 = vpack.c.bf16 %v2273, %v2273
    %v2280 = vpack.c.bf16 %v2274, %v2274
    %v2281 = vpack.c.bf16 %v2275, %v2275
    %v2282 = vpack.c.bf16 %v2276, %v2276
    %v2283 = vpack.c.bf16 %v2277, %v2277
    %v2284 = vld [vmem:[%s3] sm:$0xff]
    %v2285 = vld [vmem:[%s3 + $0x8] sm:$0xf]
    %v2286 = vld [vmem:[%s3 + $0xc] sm:$0xff]
    %v2287 = vld [vmem:[%s3 + $0x14] sm:$0xf]
    %v2288 = vld [vmem:[%s3 + $0x18] sm:$0xff]
    %v2289 = vld [vmem:[%s3 + $0x20] sm:$0xf]
    %v2290 = vld [vmem:[%s3 + $0x24] sm:$0xff]
    %v2291 = vld [vmem:[%s3 + $0x2c] sm:$0xf]
    %v2292 = vld [vmem:[%s3 + $0x30] sm:$0xff]
    %v2293 = vld [vmem:[%s3 + $0x38] sm:$0xf]
    %v2294 = vld [vmem:[%s3 + $0x3c] sm:$0xff]
    %v2295 = vld [vmem:[%s3 + $0x44] sm:$0xf]
    %v2296 = vld [vmem:[%s3 + $0x48] sm:$0xff]
    %v2297 = vld [vmem:[%s3 + $0x50] sm:$0xf]
    %v2298 = vld [vmem:[%s3 + $0x54] sm:$0xff]
    %v2299 = vld [vmem:[%s3 + $0x5c] sm:$0xf]
    %v2300 = vld [vmem:[%s3 + $0x60] sm:$0xff]
    %v2301 = vld [vmem:[%s3 + $0x68] sm:$0xf]
    %v2302 = vld [vmem:[%s3 + $0x6c] sm:$0xff]
    %v2303 = vld [vmem:[%s3 + $0x74] sm:$0xf]
    %v2304 = vld [vmem:[%s3 + $0x78] sm:$0xff]
    %v2305 = vld [vmem:[%s3 + $0x80] sm:$0xf]
    %v2306 = vld [vmem:[%s3 + $0x84] sm:$0xff]
    %v2307 = vld [vmem:[%s3 + $0x8c] sm:$0xf]
    %v2308 = vld [vmem:[%s3 + $0x90] sm:$0xff]
    %v2309 = vld [vmem:[%s3 + $0x98] sm:$0xf]
    %v2310 = vld [vmem:[%s3 + $0x9c] sm:$0xff]
    %v2311 = vld [vmem:[%s3 + $0xa4] sm:$0xf]
    %v2312 = vld [vmem:[%s3 + $0xa8] sm:$0xff]
    %v2313 = vld [vmem:[%s3 + $0xb0] sm:$0xf]
    %v2314 = vld [vmem:[%s3 + $0xb4] sm:$0xff]
    %v2315 = vld [vmem:[%s3 + $0xbc] sm:$0xf]
    %v2316 = vld [vmem:[%s3 + $0xc0] sm:$0xff]
    %v2317 = vld [vmem:[%s3 + $0xc8] sm:$0xf]
    %v2318 = vld [vmem:[%s3 + $0xcc] sm:$0xff]
    %v2319 = vld [vmem:[%s3 + $0xd4] sm:$0xf]
    %v2320 = vld [vmem:[%s3 + $0xd8] sm:$0xff]
    %v2321 = vld [vmem:[%s3 + $0xe0] sm:$0xf]
    %v2322 = vld [vmem:[%s3 + $0xe4] sm:$0xff]
    %v2323 = vld [vmem:[%s3 + $0xec] sm:$0xf]
    %v2324 = vld [vmem:[%s3 + $0xf0] sm:$0xff]
    %v2325 = vld [vmem:[%s3 + $0xf8] sm:$0xf]
    %v2326 = vld [vmem:[%s3 + $0xfc] sm:$0xff]
    %v2327 = vld [vmem:[%s3 + $0x104] sm:$0xf]
    %v2328 = vld [vmem:[%s3 + $0x108] sm:$0xff]
    %v2329 = vld [vmem:[%s3 + $0x110] sm:$0xf]
    %v2330 = vld [vmem:[%s3 + $0x114] sm:$0xff]
    %v2331 = vld [vmem:[%s3 + $0x11c] sm:$0xf]
    %v2332 = vld [vmem:[%s3 + $0x120] sm:$0xff]
    %v2333 = vld [vmem:[%s3 + $0x128] sm:$0xf]
    %v2334 = vld [vmem:[%s3 + $0x12c] sm:$0xff]
    %v2335 = vld [vmem:[%s3 + $0x134] sm:$0xf]
    %v2336 = vld [vmem:[%s3 + $0x138] sm:$0xff]
    %v2337 = vld [vmem:[%s3 + $0x140] sm:$0xf]
    %v2338 = vld [vmem:[%s3 + $0x144] sm:$0xff]
    %v2339 = vld [vmem:[%s3 + $0x14c] sm:$0xf]
    %v2340 = vld [vmem:[%s3 + $0x150] sm:$0xff]
    %v2341 = vld [vmem:[%s3 + $0x158] sm:$0xf]
    %v2342 = vld [vmem:[%s3 + $0x15c] sm:$0xff]
    %v2343 = vld [vmem:[%s3 + $0x164] sm:$0xf]
    %v2344 = vld [vmem:[%s3 + $0x168] sm:$0xff]
    %v2345 = vld [vmem:[%s3 + $0x170] sm:$0xf]
    %v2346 = vld [vmem:[%s3 + $0x174] sm:$0xff]
    %v2347 = vld [vmem:[%s3 + $0x17c] sm:$0xf]
    %v2348 = vld [vmem:[%s3 + $0x180] sm:$0xff]
    %v2349 = vld [vmem:[%s3 + $0x188] sm:$0xf]
    %v2350 = vld [vmem:[%s3 + $0x18c] sm:$0xff]
    %v2351 = vld [vmem:[%s3 + $0x194] sm:$0xf]
    %v2352 = vld [vmem:[%s3 + $0x198] sm:$0xff]
    %v2353 = vld [vmem:[%s3 + $0x1a0] sm:$0xf]
    %v2354 = vld [vmem:[%s3 + $0x1a4] sm:$0xff]
    %v2355 = vld [vmem:[%s3 + $0x1ac] sm:$0xf]
    %v2356 = vld [vmem:[%s3 + $0x1b0] sm:$0xff]
    %v2357 = vld [vmem:[%s3 + $0x1b8] sm:$0xf]
    %v2358 = vld [vmem:[%s3 + $0x1bc] sm:$0xff]
    %v2359 = vld [vmem:[%s3 + $0x1c4] sm:$0xf]
    %v2360 = vld [vmem:[%s3 + $0x1c8] sm:$0xff]
    %v2361 = vld [vmem:[%s3 + $0x1d0] sm:$0xf]
    %v2362 = vld [vmem:[%s3 + $0x1d4] sm:$0xff]
    %v2363 = vld [vmem:[%s3 + $0x1dc] sm:$0xf]
    %v2364 = vld [vmem:[%s3 + $0x1e0] sm:$0xff]
    %v2365 = vld [vmem:[%s3 + $0x1e8] sm:$0xf]
    %v2366 = vld [vmem:[%s3 + $0x1ec] sm:$0xff]
    %v2367 = vld [vmem:[%s3 + $0x1f4] sm:$0xf]
    %v2368 = vld [vmem:[%s3 + $0x1f8] sm:$0xff]
    %v2369 = vld [vmem:[%s3 + $0x200] sm:$0xf]
    %v2370 = vld [vmem:[%s3 + $0x204] sm:$0xff]
    %v2371 = vld [vmem:[%s3 + $0x20c] sm:$0xf]
    %v2372 = vld [vmem:[%s3 + $0x210] sm:$0xff]
    %v2373 = vld [vmem:[%s3 + $0x218] sm:$0xf]
    %v2374 = vld [vmem:[%s3 + $0x21c] sm:$0xff]
    %v2375 = vld [vmem:[%s3 + $0x224] sm:$0xf]
    %v2376 = vld [vmem:[%s3 + $0x228] sm:$0xff]
    %v2377 = vld [vmem:[%s3 + $0x230] sm:$0xf]
    %v2378 = vld [vmem:[%s3 + $0x234] sm:$0xff]
    %v2379 = vld [vmem:[%s3 + $0x23c] sm:$0xf]
    %v2380 = vld [vmem:[%s3 + $0x240] sm:$0xff]
    %v2381 = vld [vmem:[%s3 + $0x248] sm:$0xf]
    %v2382 = vld [vmem:[%s3 + $0x24c] sm:$0xff]
    %v2383 = vld [vmem:[%s3 + $0x254] sm:$0xf]
    %v2384 = vld [vmem:[%s3 + $0x258] sm:$0xff]
    %v2385 = vld [vmem:[%s3 + $0x260] sm:$0xf]
    %v2386 = vld [vmem:[%s3 + $0x264] sm:$0xff]
    %v2387 = vld [vmem:[%s3 + $0x26c] sm:$0xf]
    %v2388 = vld [vmem:[%s3 + $0x270] sm:$0xff]
    %v2389 = vld [vmem:[%s3 + $0x278] sm:$0xf]
    %v2390 = vld [vmem:[%s3 + $0x27c] sm:$0xff]
    %v2391 = vld [vmem:[%s3 + $0x284] sm:$0xf]
    %v2392 = vld [vmem:[%s3 + $0x288] sm:$0xff]
    %v2393 = vld [vmem:[%s3 + $0x290] sm:$0xf]
    %v2394 = vld [vmem:[%s3 + $0x294] sm:$0xff]
    %v2395 = vld [vmem:[%s3 + $0x29c] sm:$0xf]
    %v2396 = vld [vmem:[%s3 + $0x2a0] sm:$0xff]
    %v2397 = vld [vmem:[%s3 + $0x2a8] sm:$0xf]
    %v2398 = vld [vmem:[%s3 + $0x2ac] sm:$0xff]
    %v2399 = vld [vmem:[%s3 + $0x2b4] sm:$0xf]
    %v2400 = vld [vmem:[%s3 + $0x2b8] sm:$0xff]
    %v2401 = vld [vmem:[%s3 + $0x2c0] sm:$0xf]
    %v2402 = vld [vmem:[%s3 + $0x2c4] sm:$0xff]
    %v2403 = vld [vmem:[%s3 + $0x2cc] sm:$0xf]
    %v2404 = vld [vmem:[%s3 + $0x2d0] sm:$0xff]
    %v2405 = vld [vmem:[%s3 + $0x2d8] sm:$0xf]
    %v2406 = vld [vmem:[%s3 + $0x2dc] sm:$0xff]
    %v2407 = vld [vmem:[%s3 + $0x2e4] sm:$0xf]
    %v2408 = vld [vmem:[%s3 + $0x2e8] sm:$0xff]
    %v2409 = vld [vmem:[%s3 + $0x2f0] sm:$0xf]
    %v2410 = vld [vmem:[%s3 + $0x2f4] sm:$0xff]
    %v2411 = vld [vmem:[%s3 + $0x2fc] sm:$0xf]
    %v2412 = vld [vmem:[%s3 + $0x300] sm:$0xff]
    %v2413 = vld [vmem:[%s3 + $0x308] sm:$0xf]
    %v2414 = vld [vmem:[%s3 + $0x30c] sm:$0xff]
    %v2415 = vld [vmem:[%s3 + $0x314] sm:$0xf]
    %v2416 = vld [vmem:[%s3 + $0x318] sm:$0xff]
    %v2417 = vld [vmem:[%s3 + $0x320] sm:$0xf]
    %v2418 = vld [vmem:[%s3 + $0x324] sm:$0xff]
    %v2419 = vld [vmem:[%s3 + $0x32c] sm:$0xf]
    %v2420 = vld [vmem:[%s3 + $0x330] sm:$0xff]
    %v2421 = vld [vmem:[%s3 + $0x338] sm:$0xf]
    %v2422 = vld [vmem:[%s3 + $0x33c] sm:$0xff]
    %v2423 = vld [vmem:[%s3 + $0x344] sm:$0xf]
    %v2424 = vld [vmem:[%s3 + $0x348] sm:$0xff]
    %v2425 = vld [vmem:[%s3 + $0x350] sm:$0xf]
    %v2426 = vld [vmem:[%s3 + $0x354] sm:$0xff]
    %v2427 = vld [vmem:[%s3 + $0x35c] sm:$0xf]
    %v2428 = vld [vmem:[%s3 + $0x360] sm:$0xff]
    %v2429 = vld [vmem:[%s3 + $0x368] sm:$0xf]
    %v2430 = vld [vmem:[%s3 + $0x36c] sm:$0xff]
    %v2431 = vld [vmem:[%s3 + $0x374] sm:$0xf]
    %v2432 = vld [vmem:[%s3 + $0x378] sm:$0xff]
    %v2433 = vld [vmem:[%s3 + $0x380] sm:$0xf]
    %v2434 = vld [vmem:[%s3 + $0x384] sm:$0xff]
    %v2435 = vld [vmem:[%s3 + $0x38c] sm:$0xf]
    %v2436 = vld [vmem:[%s3 + $0x390] sm:$0xff]
    %v2437 = vld [vmem:[%s3 + $0x398] sm:$0xf]
    %v2438 = vld [vmem:[%s3 + $0x39c] sm:$0xff]
    %v2439 = vld [vmem:[%s3 + $0x3a4] sm:$0xf]
    %v2440 = vld [vmem:[%s3 + $0x3a8] sm:$0xff]
    %v2441 = vld [vmem:[%s3 + $0x3b0] sm:$0xf]
    %v2442 = vld [vmem:[%s3 + $0x3b4] sm:$0xff]
    %v2443 = vld [vmem:[%s3 + $0x3bc] sm:$0xf]
    %v2444 = vld [vmem:[%s3 + $0x3c0] sm:$0xff]
    %v2445 = vld [vmem:[%s3 + $0x3c8] sm:$0xf]
    %v2446 = vld [vmem:[%s3 + $0x3cc] sm:$0xff]
    %v2447 = vld [vmem:[%s3 + $0x3d4] sm:$0xf]
    %v2448 = vld [vmem:[%s3 + $0x3d8] sm:$0xff]
    %v2449 = vld [vmem:[%s3 + $0x3e0] sm:$0xf]
    %v2450 = vld [vmem:[%s3 + $0x3e4] sm:$0xff]
    %v2451 = vld [vmem:[%s3 + $0x3ec] sm:$0xf]
    %v2452 = vld [vmem:[%s3 + $0x3f0] sm:$0xff]
    %v2453 = vld [vmem:[%s3 + $0x3f8] sm:$0xf]
    %v2454 = vld [vmem:[%s3 + $0x3fc] sm:$0xff]
    %v2455 = vld [vmem:[%s3 + $0x404] sm:$0xf]
    %v2456 = vld [vmem:[%s3 + $0x408] sm:$0xff]
    %v2457 = vld [vmem:[%s3 + $0x410] sm:$0xf]
    %v2458 = vld [vmem:[%s3 + $0x414] sm:$0xff]
    %v2459 = vld [vmem:[%s3 + $0x41c] sm:$0xf]
    %v2460 = vld [vmem:[%s3 + $0x420] sm:$0xff]
    %v2461 = vld [vmem:[%s3 + $0x428] sm:$0xf]
    %v2462 = vld [vmem:[%s3 + $0x42c] sm:$0xff]
    %v2463 = vld [vmem:[%s3 + $0x434] sm:$0xf]
    %v2464 = vld [vmem:[%s3 + $0x438] sm:$0xff]
    %v2465 = vld [vmem:[%s3 + $0x440] sm:$0xf]
    %v2466 = vld [vmem:[%s3 + $0x444] sm:$0xff]
    %v2467 = vld [vmem:[%s3 + $0x44c] sm:$0xf]
    %v2468 = vld [vmem:[%s3 + $0x450] sm:$0xff]
    %v2469 = vld [vmem:[%s3 + $0x458] sm:$0xf]
    %v2470 = vld [vmem:[%s3 + $0x45c] sm:$0xff]
    %v2471 = vld [vmem:[%s3 + $0x464] sm:$0xf]
    %v2472 = vld [vmem:[%s3 + $0x468] sm:$0xff]
    %v2473 = vld [vmem:[%s3 + $0x470] sm:$0xf]
    %v2474 = vld [vmem:[%s3 + $0x474] sm:$0xff]
    %v2475 = vld [vmem:[%s3 + $0x47c] sm:$0xf]
    %v2476 = vld [vmem:[%s4] sm:$0x7]
    %v2478 = vperm.slane %v2476, 0
    %v2479 = vperm.slane %v2476, 1
    %v2480 = vperm.slane %v2476, 2
    %v2676 = vunpack.c.l.b16 %v2284
    %v2677 = vunpack.c.h.b16 %v2284
    %v2678 = vunpack.c.l.b16 %v2285
    %v2679 = vunpack.c.l.b16 %v2286
    %v2680 = vunpack.c.h.b16 %v2286
    %v2681 = vunpack.c.l.b16 %v2287
    %v2682 = vunpack.c.l.b16 %v2288
    %v2683 = vunpack.c.h.b16 %v2288
    %v2684 = vunpack.c.l.b16 %v2289
    %v2685 = vunpack.c.l.b16 %v2290
    %v2686 = vunpack.c.h.b16 %v2290
    %v2687 = vunpack.c.l.b16 %v2291
    %v2688 = vunpack.c.l.b16 %v2292
    %v2689 = vunpack.c.h.b16 %v2292
    %v2690 = vunpack.c.l.b16 %v2293
    %v2691 = vunpack.c.l.b16 %v2294
    %v2692 = vunpack.c.h.b16 %v2294
    %v2693 = vunpack.c.l.b16 %v2295
    %v2694 = vunpack.c.l.b16 %v2296
    %v2695 = vunpack.c.h.b16 %v2296
    %v2696 = vunpack.c.l.b16 %v2297
    %v2697 = vunpack.c.l.b16 %v2298
    %v2698 = vunpack.c.h.b16 %v2298
    %v2699 = vunpack.c.l.b16 %v2299
    %v2700 = vunpack.c.l.b16 %v2300
    %v2701 = vunpack.c.h.b16 %v2300
    %v2702 = vunpack.c.l.b16 %v2301
    %v2703 = vunpack.c.l.b16 %v2302
    %v2704 = vunpack.c.h.b16 %v2302
    %v2705 = vunpack.c.l.b16 %v2303
    %v2706 = vunpack.c.l.b16 %v2304
    %v2707 = vunpack.c.h.b16 %v2304
    %v2708 = vunpack.c.l.b16 %v2305
    %v2709 = vunpack.c.l.b16 %v2306
    %v2710 = vunpack.c.h.b16 %v2306
    %v2711 = vunpack.c.l.b16 %v2307
    %v2712 = vunpack.c.l.b16 %v2308
    %v2713 = vunpack.c.h.b16 %v2308
    %v2714 = vunpack.c.l.b16 %v2309
    %v2715 = vunpack.c.l.b16 %v2310
    %v2716 = vunpack.c.h.b16 %v2310
    %v2717 = vunpack.c.l.b16 %v2311
    %v2718 = vunpack.c.l.b16 %v2312
    %v2719 = vunpack.c.h.b16 %v2312
    %v2720 = vunpack.c.l.b16 %v2313
    %v2721 = vunpack.c.l.b16 %v2314
    %v2722 = vunpack.c.h.b16 %v2314
    %v2723 = vunpack.c.l.b16 %v2315
    %v2724 = vunpack.c.l.b16 %v2316
    %v2725 = vunpack.c.h.b16 %v2316
    %v2726 = vunpack.c.l.b16 %v2317
    %v2727 = vunpack.c.l.b16 %v2318
    %v2728 = vunpack.c.h.b16 %v2318
    %v2729 = vunpack.c.l.b16 %v2319
    %v2730 = vunpack.c.l.b16 %v2320
    %v2731 = vunpack.c.h.b16 %v2320
    %v2732 = vunpack.c.l.b16 %v2321
    %v2733 = vunpack.c.l.b16 %v2322
    %v2734 = vunpack.c.h.b16 %v2322
    %v2735 = vunpack.c.l.b16 %v2323
    %v2736 = vunpack.c.l.b16 %v2324
    %v2737 = vunpack.c.h.b16 %v2324
    %v2738 = vunpack.c.l.b16 %v2325
    %v2739 = vunpack.c.l.b16 %v2326
    %v2740 = vunpack.c.h.b16 %v2326
    %v2741 = vunpack.c.l.b16 %v2327
    %v2742 = vunpack.c.l.b16 %v2328
    %v2743 = vunpack.c.h.b16 %v2328
    %v2744 = vunpack.c.l.b16 %v2329
    %v2745 = vunpack.c.l.b16 %v2330
    %v2746 = vunpack.c.h.b16 %v2330
    %v2747 = vunpack.c.l.b16 %v2331
    %v2748 = vunpack.c.l.b16 %v2332
    %v2749 = vunpack.c.h.b16 %v2332
    %v2750 = vunpack.c.l.b16 %v2333
    %v2751 = vunpack.c.l.b16 %v2334
    %v2752 = vunpack.c.h.b16 %v2334
    %v2753 = vunpack.c.l.b16 %v2335
    %v2754 = vunpack.c.l.b16 %v2336
    %v2755 = vunpack.c.h.b16 %v2336
    %v2756 = vunpack.c.l.b16 %v2337
    %v2757 = vunpack.c.l.b16 %v2338
    %v2758 = vunpack.c.h.b16 %v2338
    %v2759 = vunpack.c.l.b16 %v2339
    %v2760 = vunpack.c.l.b16 %v2340
    %v2761 = vunpack.c.h.b16 %v2340
    %v2762 = vunpack.c.l.b16 %v2341
    %v2763 = vunpack.c.l.b16 %v2342
    %v2764 = vunpack.c.h.b16 %v2342
    %v2765 = vunpack.c.l.b16 %v2343
    %v2766 = vunpack.c.l.b16 %v2344
    %v2767 = vunpack.c.h.b16 %v2344
    %v2768 = vunpack.c.l.b16 %v2345
    %v2769 = vunpack.c.l.b16 %v2346
    %v2770 = vunpack.c.h.b16 %v2346
    %v2771 = vunpack.c.l.b16 %v2347
    %v2772 = vunpack.c.l.b16 %v2348
    %v2773 = vunpack.c.h.b16 %v2348
    %v2774 = vunpack.c.l.b16 %v2349
    %v2775 = vunpack.c.l.b16 %v2350
    %v2776 = vunpack.c.h.b16 %v2350
    %v2777 = vunpack.c.l.b16 %v2351
    %v2778 = vunpack.c.l.b16 %v2352
    %v2779 = vunpack.c.h.b16 %v2352
    %v2780 = vunpack.c.l.b16 %v2353
    %v2781 = vunpack.c.l.b16 %v2354
    %v2782 = vunpack.c.h.b16 %v2354
    %v2783 = vunpack.c.l.b16 %v2355
    %v2784 = vunpack.c.l.b16 %v2356
    %v2785 = vunpack.c.h.b16 %v2356
    %v2786 = vunpack.c.l.b16 %v2357
    %v2787 = vunpack.c.l.b16 %v2358
    %v2788 = vunpack.c.h.b16 %v2358
    %v2789 = vunpack.c.l.b16 %v2359
    %v2790 = vunpack.c.l.b16 %v2360
    %v2791 = vunpack.c.h.b16 %v2360
    %v2792 = vunpack.c.l.b16 %v2361
    %v2793 = vunpack.c.l.b16 %v2362
    %v2794 = vunpack.c.h.b16 %v2362
    %v2795 = vunpack.c.l.b16 %v2363
    %v2796 = vunpack.c.l.b16 %v2364
    %v2797 = vunpack.c.h.b16 %v2364
    %v2798 = vunpack.c.l.b16 %v2365
    %v2799 = vunpack.c.l.b16 %v2366
    %v2800 = vunpack.c.h.b16 %v2366
    %v2801 = vunpack.c.l.b16 %v2367
    %v2802 = vunpack.c.l.b16 %v2368
    %v2803 = vunpack.c.h.b16 %v2368
    %v2804 = vunpack.c.l.b16 %v2369
    %v2805 = vunpack.c.l.b16 %v2370
    %v2806 = vunpack.c.h.b16 %v2370
    %v2807 = vunpack.c.l.b16 %v2371
    %v2808 = vunpack.c.l.b16 %v2372
    %v2809 = vunpack.c.h.b16 %v2372
    %v2810 = vunpack.c.l.b16 %v2373
    %v2811 = vunpack.c.l.b16 %v2374
    %v2812 = vunpack.c.h.b16 %v2374
    %v2813 = vunpack.c.l.b16 %v2375
    %v2814 = vunpack.c.l.b16 %v2376
    %v2815 = vunpack.c.h.b16 %v2376
    %v2816 = vunpack.c.l.b16 %v2377
    %v2817 = vunpack.c.l.b16 %v2378
    %v2818 = vunpack.c.h.b16 %v2378
    %v2819 = vunpack.c.l.b16 %v2379
    %v2820 = vunpack.c.l.b16 %v2380
    %v2821 = vunpack.c.h.b16 %v2380
    %v2822 = vunpack.c.l.b16 %v2381
    %v2823 = vunpack.c.l.b16 %v2382
    %v2824 = vunpack.c.h.b16 %v2382
    %v2825 = vunpack.c.l.b16 %v2383
    %v2826 = vunpack.c.l.b16 %v2384
    %v2827 = vunpack.c.h.b16 %v2384
    %v2828 = vunpack.c.l.b16 %v2385
    %v2829 = vunpack.c.l.b16 %v2386
    %v2830 = vunpack.c.h.b16 %v2386
    %v2831 = vunpack.c.l.b16 %v2387
    %v2832 = vunpack.c.l.b16 %v2388
    %v2833 = vunpack.c.h.b16 %v2388
    %v2834 = vunpack.c.l.b16 %v2389
    %v2835 = vunpack.c.l.b16 %v2390
    %v2836 = vunpack.c.h.b16 %v2390
    %v2837 = vunpack.c.l.b16 %v2391
    %v2838 = vunpack.c.l.b16 %v2392
    %v2839 = vunpack.c.h.b16 %v2392
    %v2840 = vunpack.c.l.b16 %v2393
    %v2841 = vunpack.c.l.b16 %v2394
    %v2842 = vunpack.c.h.b16 %v2394
    %v2843 = vunpack.c.l.b16 %v2395
    %v2844 = vunpack.c.l.b16 %v2396
    %v2845 = vunpack.c.h.b16 %v2396
    %v2846 = vunpack.c.l.b16 %v2397
    %v2847 = vunpack.c.l.b16 %v2398
    %v2848 = vunpack.c.h.b16 %v2398
    %v2849 = vunpack.c.l.b16 %v2399
    %v2850 = vunpack.c.l.b16 %v2400
    %v2851 = vunpack.c.h.b16 %v2400
    %v2852 = vunpack.c.l.b16 %v2401
    %v2853 = vunpack.c.l.b16 %v2402
    %v2854 = vunpack.c.h.b16 %v2402
    %v2855 = vunpack.c.l.b16 %v2403
    %v2856 = vunpack.c.l.b16 %v2404
    %v2857 = vunpack.c.h.b16 %v2404
    %v2858 = vunpack.c.l.b16 %v2405
    %v2859 = vunpack.c.l.b16 %v2406
    %v2860 = vunpack.c.h.b16 %v2406
    %v2861 = vunpack.c.l.b16 %v2407
    %v2862 = vunpack.c.l.b16 %v2408
    %v2863 = vunpack.c.h.b16 %v2408
    %v2864 = vunpack.c.l.b16 %v2409
    %v2865 = vunpack.c.l.b16 %v2410
    %v2866 = vunpack.c.h.b16 %v2410
    %v2867 = vunpack.c.l.b16 %v2411
    %v2868 = vunpack.c.l.b16 %v2412
    %v2869 = vunpack.c.h.b16 %v2412
    %v2870 = vunpack.c.l.b16 %v2413
    %v2871 = vunpack.c.l.b16 %v2414
    %v2872 = vunpack.c.h.b16 %v2414
    %v2873 = vunpack.c.l.b16 %v2415
    %v2874 = vunpack.c.l.b16 %v2416
    %v2875 = vunpack.c.h.b16 %v2416
    %v2876 = vunpack.c.l.b16 %v2417
    %v2877 = vunpack.c.l.b16 %v2418
    %v2878 = vunpack.c.h.b16 %v2418
    %v2879 = vunpack.c.l.b16 %v2419
    %v2880 = vunpack.c.l.b16 %v2420
    %v2881 = vunpack.c.h.b16 %v2420
    %v2882 = vunpack.c.l.b16 %v2421
    %v2883 = vunpack.c.l.b16 %v2422
    %v2884 = vunpack.c.h.b16 %v2422
    %v2885 = vunpack.c.l.b16 %v2423
    %v2886 = vunpack.c.l.b16 %v2424
    %v2887 = vunpack.c.h.b16 %v2424
    %v2888 = vunpack.c.l.b16 %v2425
    %v2889 = vunpack.c.l.b16 %v2426
    %v2890 = vunpack.c.h.b16 %v2426
    %v2891 = vunpack.c.l.b16 %v2427
    %v2892 = vunpack.c.l.b16 %v2428
    %v2893 = vunpack.c.h.b16 %v2428
    %v2894 = vunpack.c.l.b16 %v2429
    %v2895 = vunpack.c.l.b16 %v2430
    %v2896 = vunpack.c.h.b16 %v2430
    %v2897 = vunpack.c.l.b16 %v2431
    %v2898 = vunpack.c.l.b16 %v2432
    %v2899 = vunpack.c.h.b16 %v2432
    %v2900 = vunpack.c.l.b16 %v2433
    %v2901 = vunpack.c.l.b16 %v2434
    %v2902 = vunpack.c.h.b16 %v2434
    %v2903 = vunpack.c.l.b16 %v2435
    %v2904 = vunpack.c.l.b16 %v2436
    %v2905 = vunpack.c.h.b16 %v2436
    %v2906 = vunpack.c.l.b16 %v2437
    %v2907 = vunpack.c.l.b16 %v2438
    %v2908 = vunpack.c.h.b16 %v2438
    %v2909 = vunpack.c.l.b16 %v2439
    %v2910 = vunpack.c.l.b16 %v2440
    %v2911 = vunpack.c.h.b16 %v2440
    %v2912 = vunpack.c.l.b16 %v2441
    %v2913 = vunpack.c.l.b16 %v2442
    %v2914 = vunpack.c.h.b16 %v2442
    %v2915 = vunpack.c.l.b16 %v2443
    %v2916 = vunpack.c.l.b16 %v2444
    %v2917 = vunpack.c.h.b16 %v2444
    %v2918 = vunpack.c.l.b16 %v2445
    %v2919 = vunpack.c.l.b16 %v2446
    %v2920 = vunpack.c.h.b16 %v2446
    %v2921 = vunpack.c.l.b16 %v2447
    %v2922 = vunpack.c.l.b16 %v2448
    %v2923 = vunpack.c.h.b16 %v2448
    %v2924 = vunpack.c.l.b16 %v2449
    %v2925 = vunpack.c.l.b16 %v2450
    %v2926 = vunpack.c.h.b16 %v2450
    %v2927 = vunpack.c.l.b16 %v2451
    %v2928 = vunpack.c.l.b16 %v2452
    %v2929 = vunpack.c.h.b16 %v2452
    %v2930 = vunpack.c.l.b16 %v2453
    %v2931 = vunpack.c.l.b16 %v2454
    %v2932 = vunpack.c.h.b16 %v2454
    %v2933 = vunpack.c.l.b16 %v2455
    %v2934 = vunpack.c.l.b16 %v2456
    %v2935 = vunpack.c.h.b16 %v2456
    %v2936 = vunpack.c.l.b16 %v2457
    %v2937 = vunpack.c.l.b16 %v2458
    %v2938 = vunpack.c.h.b16 %v2458
    %v2939 = vunpack.c.l.b16 %v2459
    %v2940 = vunpack.c.l.b16 %v2460
    %v2941 = vunpack.c.h.b16 %v2460
    %v2942 = vunpack.c.l.b16 %v2461
    %v2943 = vunpack.c.l.b16 %v2462
    %v2944 = vunpack.c.h.b16 %v2462
    %v2945 = vunpack.c.l.b16 %v2463
    %v2946 = vunpack.c.l.b16 %v2464
    %v2947 = vunpack.c.h.b16 %v2464
    %v2948 = vunpack.c.l.b16 %v2465
    %v2949 = vunpack.c.l.b16 %v2466
    %v2950 = vunpack.c.h.b16 %v2466
    %v2951 = vunpack.c.l.b16 %v2467
    %v2952 = vunpack.c.l.b16 %v2468
    %v2953 = vunpack.c.h.b16 %v2468
    %v2954 = vunpack.c.l.b16 %v2469
    %v2955 = vunpack.c.l.b16 %v2470
    %v2956 = vunpack.c.h.b16 %v2470
    %v2957 = vunpack.c.l.b16 %v2471
    %v2958 = vunpack.c.l.b16 %v2472
    %v2959 = vunpack.c.h.b16 %v2472
    %v2960 = vunpack.c.l.b16 %v2473
    %v2961 = vunpack.c.l.b16 %v2474
    %v2962 = vunpack.c.h.b16 %v2474
    %v2963 = vunpack.c.l.b16 %v2475
    %v2964 = vpack.c.b16 %v2679, %v2676
    %v2965 = vpack.c.b16 %v2680, %v2677
    %v2966 = vpack.c.b16 %v2681, %v2678
    %v2967 = vpack.c.b16 %v2685, %v2682
    %v2968 = vpack.c.b16 %v2686, %v2683
    %v2969 = vpack.c.b16 %v2687, %v2684
    %v2970 = vpack.c.b16 %v2691, %v2688
    %v2971 = vpack.c.b16 %v2692, %v2689
    %v2972 = vpack.c.b16 %v2693, %v2690
    %v2973 = vpack.c.b16 %v2697, %v2694
    %v2974 = vpack.c.b16 %v2698, %v2695
    %v2975 = vpack.c.b16 %v2699, %v2696
    %v2976 = vpack.c.b16 %v2703, %v2700
    %v2977 = vpack.c.b16 %v2704, %v2701
    %v2978 = vpack.c.b16 %v2705, %v2702
    %v2979 = vpack.c.b16 %v2709, %v2706
    %v2980 = vpack.c.b16 %v2710, %v2707
    %v2981 = vpack.c.b16 %v2711, %v2708
    %v2982 = vpack.c.b16 %v2715, %v2712
    %v2983 = vpack.c.b16 %v2716, %v2713
    %v2984 = vpack.c.b16 %v2717, %v2714
    %v2985 = vpack.c.b16 %v2721, %v2718
    %v2986 = vpack.c.b16 %v2722, %v2719
    %v2987 = vpack.c.b16 %v2723, %v2720
    %v2988 = vpack.c.b16 %v2727, %v2724
    %v2989 = vpack.c.b16 %v2728, %v2725
    %v2990 = vpack.c.b16 %v2729, %v2726
    %v2991 = vpack.c.b16 %v2733, %v2730
    %v2992 = vpack.c.b16 %v2734, %v2731
    %v2993 = vpack.c.b16 %v2735, %v2732
    %v2994 = vpack.c.b16 %v2739, %v2736
    %v2995 = vpack.c.b16 %v2740, %v2737
    %v2996 = vpack.c.b16 %v2741, %v2738
    %v2997 = vpack.c.b16 %v2745, %v2742
    %v2998 = vpack.c.b16 %v2746, %v2743
    %v2999 = vpack.c.b16 %v2747, %v2744
    %v3000 = vpack.c.b16 %v2751, %v2748
    %v3001 = vpack.c.b16 %v2752, %v2749
    %v3002 = vpack.c.b16 %v2753, %v2750
    %v3003 = vpack.c.b16 %v2757, %v2754
    %v3004 = vpack.c.b16 %v2758, %v2755
    %v3005 = vpack.c.b16 %v2759, %v2756
    %v3006 = vpack.c.b16 %v2763, %v2760
    %v3007 = vpack.c.b16 %v2764, %v2761
    %v3008 = vpack.c.b16 %v2765, %v2762
    %v3009 = vpack.c.b16 %v2769, %v2766
    %v3010 = vpack.c.b16 %v2770, %v2767
    %v3011 = vpack.c.b16 %v2771, %v2768
    %v3012 = vpack.c.b16 %v2775, %v2772
    %v3013 = vpack.c.b16 %v2776, %v2773
    %v3014 = vpack.c.b16 %v2777, %v2774
    %v3015 = vpack.c.b16 %v2781, %v2778
    %v3016 = vpack.c.b16 %v2782, %v2779
    %v3017 = vpack.c.b16 %v2783, %v2780
    %v3018 = vpack.c.b16 %v2787, %v2784
    %v3019 = vpack.c.b16 %v2788, %v2785
    %v3020 = vpack.c.b16 %v2789, %v2786
    %v3021 = vpack.c.b16 %v2793, %v2790
    %v3022 = vpack.c.b16 %v2794, %v2791
    %v3023 = vpack.c.b16 %v2795, %v2792
    %v3024 = vpack.c.b16 %v2799, %v2796
    %v3025 = vpack.c.b16 %v2800, %v2797
    %v3026 = vpack.c.b16 %v2801, %v2798
    %v3027 = vpack.c.b16 %v2805, %v2802
    %v3028 = vpack.c.b16 %v2806, %v2803
    %v3029 = vpack.c.b16 %v2807, %v2804
    %v3030 = vpack.c.b16 %v2811, %v2808
    %v3031 = vpack.c.b16 %v2812, %v2809
    %v3032 = vpack.c.b16 %v2813, %v2810
    %v3033 = vpack.c.b16 %v2817, %v2814
    %v3034 = vpack.c.b16 %v2818, %v2815
    %v3035 = vpack.c.b16 %v2819, %v2816
    %v3036 = vpack.c.b16 %v2823, %v2820
    %v3037 = vpack.c.b16 %v2824, %v2821
    %v3038 = vpack.c.b16 %v2825, %v2822
    %v3039 = vpack.c.b16 %v2829, %v2826
    %v3040 = vpack.c.b16 %v2830, %v2827
    %v3041 = vpack.c.b16 %v2831, %v2828
    %v3042 = vpack.c.b16 %v2835, %v2832
    %v3043 = vpack.c.b16 %v2836, %v2833
    %v3044 = vpack.c.b16 %v2837, %v2834
    %v3045 = vpack.c.b16 %v2841, %v2838
    %v3046 = vpack.c.b16 %v2842, %v2839
    %v3047 = vpack.c.b16 %v2843, %v2840
    %v3048 = vpack.c.b16 %v2847, %v2844
    %v3049 = vpack.c.b16 %v2848, %v2845
    %v3050 = vpack.c.b16 %v2849, %v2846
    %v3051 = vpack.c.b16 %v2853, %v2850
    %v3052 = vpack.c.b16 %v2854, %v2851
    %v3053 = vpack.c.b16 %v2855, %v2852
    %v3054 = vpack.c.b16 %v2859, %v2856
    %v3055 = vpack.c.b16 %v2860, %v2857
    %v3056 = vpack.c.b16 %v2861, %v2858
    %v3057 = vpack.c.b16 %v2865, %v2862
    %v3058 = vpack.c.b16 %v2866, %v2863
    %v3059 = vpack.c.b16 %v2867, %v2864
    %v3060 = vpack.c.b16 %v2871, %v2868
    %v3061 = vpack.c.b16 %v2872, %v2869
    %v3062 = vpack.c.b16 %v2873, %v2870
    %v3063 = vpack.c.b16 %v2877, %v2874
    %v3064 = vpack.c.b16 %v2878, %v2875
    %v3065 = vpack.c.b16 %v2879, %v2876
    %v3066 = vpack.c.b16 %v2883, %v2880
    %v3067 = vpack.c.b16 %v2884, %v2881
    %v3068 = vpack.c.b16 %v2885, %v2882
    %v3069 = vpack.c.b16 %v2889, %v2886
    %v3070 = vpack.c.b16 %v2890, %v2887
    %v3071 = vpack.c.b16 %v2891, %v2888
    %v3072 = vpack.c.b16 %v2895, %v2892
    %v3073 = vpack.c.b16 %v2896, %v2893
    %v3074 = vpack.c.b16 %v2897, %v2894
    %v3075 = vpack.c.b16 %v2901, %v2898
    %v3076 = vpack.c.b16 %v2902, %v2899
    %v3077 = vpack.c.b16 %v2903, %v2900
    %v3078 = vpack.c.b16 %v2907, %v2904
    %v3079 = vpack.c.b16 %v2908, %v2905
    %v3080 = vpack.c.b16 %v2909, %v2906
    %v3081 = vpack.c.b16 %v2913, %v2910
    %v3082 = vpack.c.b16 %v2914, %v2911
    %v3083 = vpack.c.b16 %v2915, %v2912
    %v3084 = vpack.c.b16 %v2919, %v2916
    %v3085 = vpack.c.b16 %v2920, %v2917
    %v3086 = vpack.c.b16 %v2921, %v2918
    %v3087 = vpack.c.b16 %v2925, %v2922
    %v3088 = vpack.c.b16 %v2926, %v2923
    %v3089 = vpack.c.b16 %v2927, %v2924
    %v3090 = vpack.c.b16 %v2931, %v2928
    %v3091 = vpack.c.b16 %v2932, %v2929
    %v3092 = vpack.c.b16 %v2933, %v2930
    %v3093 = vpack.c.b16 %v2937, %v2934
    %v3094 = vpack.c.b16 %v2938, %v2935
    %v3095 = vpack.c.b16 %v2939, %v2936
    %v3096 = vpack.c.b16 %v2943, %v2940
    %v3097 = vpack.c.b16 %v2944, %v2941
    %v3098 = vpack.c.b16 %v2945, %v2942
    %v3099 = vpack.c.b16 %v2949, %v2946
    %v3100 = vpack.c.b16 %v2950, %v2947
    %v3101 = vpack.c.b16 %v2951, %v2948
    %v3102 = vpack.c.b16 %v2955, %v2952
    %v3103 = vpack.c.b16 %v2956, %v2953
    %v3104 = vpack.c.b16 %v2957, %v2954
    %v3105 = vpack.c.b16 %v2961, %v2958
    %v3106 = vpack.c.b16 %v2962, %v2959
    %v3107 = vpack.c.b16 %v2963, %v2960
    %3252 = vmatpush.bf16.msra.mxu0 %v2985
    %3253 = vmatpush.bf16.msra.mxu0 %v2982
    %3254 = vmatpush.bf16.msra.mxu0 %v2979
    %3255 = vmatpush.bf16.msra.mxu0 %v2976
    %3256 = vmatpush.bf16.msra.mxu0 %v2973
    %3257 = vmatpush.bf16.msra.mxu0 %v2970
    %3258 = vmatpush.bf16.msra.mxu0 %v2967
    %3259 = vmatpush.bf16.msra.mxu0 %v2964
    %3260 = vmatmul.bf16.gmra.mxu0 %v2278
    %v3261 = vpop.f32.mrf.mxu0
    %v3262 = vadd.f32 %v2478, %v3261
    %v3263 = vpop.f32.mrf.mxu0
    %3264 = vdwg.mxu0
    %3265 = vmatpush.bf16.msra.mxu0 %v3009
    %3266 = vmatpush.bf16.msra.mxu0 %v3006
    %3267 = vmatpush.bf16.msra.mxu0 %v3003
    %3268 = vmatpush.bf16.msra.mxu0 %v3000
    %3269 = vmatpush.bf16.msra.mxu0 %v2997
    %3270 = vmatpush.bf16.msra.mxu0 %v2994
    %3271 = vmatpush.bf16.msra.mxu0 %v2991
    %3272 = vmatpush.bf16.msra.mxu0 %v2988
    %3273 = vmatmul.bf16.gmra.mxu0 %v2279
    %v3274 = vpop.f32.mrf.mxu0
    %v3275 = vadd.f32 %v3262, %v3274
    %v3276 = vpop.f32.mrf.mxu0
    %3277 = vdwg.mxu0
    %3278 = vmatpush.bf16.msra.mxu0 %v3033
    %3279 = vmatpush.bf16.msra.mxu0 %v3030
    %3280 = vmatpush.bf16.msra.mxu0 %v3027
    %3281 = vmatpush.bf16.msra.mxu0 %v3024
    %3282 = vmatpush.bf16.msra.mxu0 %v3021
    %3283 = vmatpush.bf16.msra.mxu0 %v3018
    %3284 = vmatpush.bf16.msra.mxu0 %v3015
    %3285 = vmatpush.bf16.msra.mxu0 %v3012
    %3286 = vmatmul.bf16.gmra.mxu0 %v2280
    %v3287 = vpop.f32.mrf.mxu0
    %v3288 = vadd.f32 %v3275, %v3287
    %v3289 = vpop.f32.mrf.mxu0
    %3290 = vdwg.mxu0
    %3291 = vmatpush.bf16.msra.mxu0 %v3057
    %3292 = vmatpush.bf16.msra.mxu0 %v3054
    %3293 = vmatpush.bf16.msra.mxu0 %v3051
    %3294 = vmatpush.bf16.msra.mxu0 %v3048
    %3295 = vmatpush.bf16.msra.mxu0 %v3045
    %3296 = vmatpush.bf16.msra.mxu0 %v3042
    %3297 = vmatpush.bf16.msra.mxu0 %v3039
    %3298 = vmatpush.bf16.msra.mxu0 %v3036
    %3299 = vmatmul.bf16.gmra.mxu0 %v2281
    %v3300 = vpop.f32.mrf.mxu0
    %v3301 = vadd.f32 %v3288, %v3300
    %v3302 = vpop.f32.mrf.mxu0
    %3303 = vdwg.mxu0
    %3304 = vmatpush.bf16.msra.mxu0 %v3081
    %3305 = vmatpush.bf16.msra.mxu0 %v3078
    %3306 = vmatpush.bf16.msra.mxu0 %v3075
    %3307 = vmatpush.bf16.msra.mxu0 %v3072
    %3308 = vmatpush.bf16.msra.mxu0 %v3069
    %3309 = vmatpush.bf16.msra.mxu0 %v3066
    %3310 = vmatpush.bf16.msra.mxu0 %v3063
    %3311 = vmatpush.bf16.msra.mxu0 %v3060
    %3312 = vmatmul.bf16.gmra.mxu0 %v2282
    %v3313 = vpop.f32.mrf.mxu0
    %v3314 = vadd.f32 %v3301, %v3313
    %v3315 = vpop.f32.mrf.mxu0
    %3316 = vdwg.mxu0
    %3317 = vmatpush.bf16.msra.mxu0 %v3105
    %3318 = vmatpush.bf16.msra.mxu0 %v3102
    %3319 = vmatpush.bf16.msra.mxu0 %v3099
    %3320 = vmatpush.bf16.msra.mxu0 %v3096
    %3321 = vmatpush.bf16.msra.mxu0 %v3093
    %3322 = vmatpush.bf16.msra.mxu0 %v3090
    %3323 = vmatpush.bf16.msra.mxu0 %v3087
    %3324 = vmatpush.bf16.msra.mxu0 %v3084
    %3325 = vmatmul.bf16.gmra.mxu0 %v2283
    %v3326 = vpop.f32.mrf.mxu0
    %v3327 = vadd.f32 %v3314, %v3326
    %v3328 = vpop.f32.mrf.mxu0
    %3329 = vdwg.mxu0
    %3330 = vmatpush.bf16.msra.mxu0 %v2986
    %3331 = vmatpush.bf16.msra.mxu0 %v2983
    %3332 = vmatpush.bf16.msra.mxu0 %v2980
    %3333 = vmatpush.bf16.msra.mxu0 %v2977
    %3334 = vmatpush.bf16.msra.mxu0 %v2974
    %3335 = vmatpush.bf16.msra.mxu0 %v2971
    %3336 = vmatpush.bf16.msra.mxu0 %v2968
    %3337 = vmatpush.bf16.msra.mxu0 %v2965
    %3338 = vmatmul.bf16.gmra.mxu0 %v2278
    %v3339 = vpop.f32.mrf.mxu0
    %v3340 = vadd.f32 %v2479, %v3339
    %v3341 = vpop.f32.mrf.mxu0
    %3342 = vdwg.mxu0
    %3343 = vmatpush.bf16.msra.mxu0 %v3010
    %3344 = vmatpush.bf16.msra.mxu0 %v3007
    %3345 = vmatpush.bf16.msra.mxu0 %v3004
    %3346 = vmatpush.bf16.msra.mxu0 %v3001
    %3347 = vmatpush.bf16.msra.mxu0 %v2998
    %3348 = vmatpush.bf16.msra.mxu0 %v2995
    %3349 = vmatpush.bf16.msra.mxu0 %v2992
    %3350 = vmatpush.bf16.msra.mxu0 %v2989
    %3351 = vmatmul.bf16.gmra.mxu0 %v2279
    %v3352 = vpop.f32.mrf.mxu0
    %v3353 = vadd.f32 %v3340, %v3352
    %v3354 = vpop.f32.mrf.mxu0
    %3355 = vdwg.mxu0
    %3356 = vmatpush.bf16.msra.mxu0 %v3034
    %3357 = vmatpush.bf16.msra.mxu0 %v3031
    %3358 = vmatpush.bf16.msra.mxu0 %v3028
    %3359 = vmatpush.bf16.msra.mxu0 %v3025
    %3360 = vmatpush.bf16.msra.mxu0 %v3022
    %3361 = vmatpush.bf16.msra.mxu0 %v3019
    %3362 = vmatpush.bf16.msra.mxu0 %v3016
    %3363 = vmatpush.bf16.msra.mxu0 %v3013
    %3364 = vmatmul.bf16.gmra.mxu0 %v2280
    %v3365 = vpop.f32.mrf.mxu0
    %v3366 = vadd.f32 %v3353, %v3365
    %v3367 = vpop.f32.mrf.mxu0
    %3368 = vdwg.mxu0
    %3369 = vmatpush.bf16.msra.mxu0 %v3058
    %3370 = vmatpush.bf16.msra.mxu0 %v3055
    %3371 = vmatpush.bf16.msra.mxu0 %v3052
    %3372 = vmatpush.bf16.msra.mxu0 %v3049
    %3373 = vmatpush.bf16.msra.mxu0 %v3046
    %3374 = vmatpush.bf16.msra.mxu0 %v3043
    %3375 = vmatpush.bf16.msra.mxu0 %v3040
    %3376 = vmatpush.bf16.msra.mxu0 %v3037
    %3377 = vmatmul.bf16.gmra.mxu0 %v2281
    %v3378 = vpop.f32.mrf.mxu0
    %v3379 = vadd.f32 %v3366, %v3378
    %v3380 = vpop.f32.mrf.mxu0
    %3381 = vdwg.mxu0
    %3382 = vmatpush.bf16.msra.mxu0 %v3082
    %3383 = vmatpush.bf16.msra.mxu0 %v3079
    %3384 = vmatpush.bf16.msra.mxu0 %v3076
    %3385 = vmatpush.bf16.msra.mxu0 %v3073
    %3386 = vmatpush.bf16.msra.mxu0 %v3070
    %3387 = vmatpush.bf16.msra.mxu0 %v3067
    %3388 = vmatpush.bf16.msra.mxu0 %v3064
    %3389 = vmatpush.bf16.msra.mxu0 %v3061
    %3390 = vmatmul.bf16.gmra.mxu0 %v2282
    %v3391 = vpop.f32.mrf.mxu0
    %v3392 = vadd.f32 %v3379, %v3391
    %v3393 = vpop.f32.mrf.mxu0
    %3394 = vdwg.mxu0
    %3395 = vmatpush.bf16.msra.mxu0 %v3106
    %3396 = vmatpush.bf16.msra.mxu0 %v3103
    %3397 = vmatpush.bf16.msra.mxu0 %v3100
    %3398 = vmatpush.bf16.msra.mxu0 %v3097
    %3399 = vmatpush.bf16.msra.mxu0 %v3094
    %3400 = vmatpush.bf16.msra.mxu0 %v3091
    %3401 = vmatpush.bf16.msra.mxu0 %v3088
    %3402 = vmatpush.bf16.msra.mxu0 %v3085
    %3403 = vmatmul.bf16.gmra.mxu0 %v2283
    %v3404 = vpop.f32.mrf.mxu0
    %v3405 = vadd.f32 %v3392, %v3404
    %v3406 = vpop.f32.mrf.mxu0
    %3407 = vdwg.mxu0
    %3408 = vmatpush.bf16.msra.mxu0 %v2987
    %3409 = vmatpush.bf16.msra.mxu0 %v2984
    %3410 = vmatpush.bf16.msra.mxu0 %v2981
    %3411 = vmatpush.bf16.msra.mxu0 %v2978
    %3412 = vmatpush.bf16.msra.mxu0 %v2975
    %3413 = vmatpush.bf16.msra.mxu0 %v2972
    %3414 = vmatpush.bf16.msra.mxu0 %v2969
    %3415 = vmatpush.bf16.msra.mxu0 %v2966
    %3416 = vmatmul.bf16.gmra.mxu0 %v2278
    %v3417 = vpop.f32.mrf.mxu0
    %v3418 = vadd.f32 %v2480, %v3417
    %v3419 = vpop.f32.mrf.mxu0
    %3420 = vdwg.mxu0
    %3421 = vmatpush.bf16.msra.mxu0 %v3011
    %3422 = vmatpush.bf16.msra.mxu0 %v3008
    %3423 = vmatpush.bf16.msra.mxu0 %v3005
    %3424 = vmatpush.bf16.msra.mxu0 %v3002
    %3425 = vmatpush.bf16.msra.mxu0 %v2999
    %3426 = vmatpush.bf16.msra.mxu0 %v2996
    %3427 = vmatpush.bf16.msra.mxu0 %v2993
    %3428 = vmatpush.bf16.msra.mxu0 %v2990
    %3429 = vmatmul.bf16.gmra.mxu0 %v2279
    %v3430 = vpop.f32.mrf.mxu0
    %v3431 = vadd.f32 %v3418, %v3430
    %v3432 = vpop.f32.mrf.mxu0
    %3433 = vdwg.mxu0
    %3434 = vmatpush.bf16.msra.mxu0 %v3035
    %3435 = vmatpush.bf16.msra.mxu0 %v3032
    %3436 = vmatpush.bf16.msra.mxu0 %v3029
    %3437 = vmatpush.bf16.msra.mxu0 %v3026
    %3438 = vmatpush.bf16.msra.mxu0 %v3023
    %3439 = vmatpush.bf16.msra.mxu0 %v3020
    %3440 = vmatpush.bf16.msra.mxu0 %v3017
    %3441 = vmatpush.bf16.msra.mxu0 %v3014
    %3442 = vmatmul.bf16.gmra.mxu0 %v2280
    %v3443 = vpop.f32.mrf.mxu0
    %v3444 = vadd.f32 %v3431, %v3443
    %v3445 = vpop.f32.mrf.mxu0
    %3446 = vdwg.mxu0
    %3447 = vmatpush.bf16.msra.mxu0 %v3059
    %3448 = vmatpush.bf16.msra.mxu0 %v3056
    %3449 = vmatpush.bf16.msra.mxu0 %v3053
    %3450 = vmatpush.bf16.msra.mxu0 %v3050
    %3451 = vmatpush.bf16.msra.mxu0 %v3047
    %3452 = vmatpush.bf16.msra.mxu0 %v3044
    %3453 = vmatpush.bf16.msra.mxu0 %v3041
    %3454 = vmatpush.bf16.msra.mxu0 %v3038
    %3455 = vmatmul.bf16.gmra.mxu0 %v2281
    %v3456 = vpop.f32.mrf.mxu0
    %v3457 = vadd.f32 %v3444, %v3456
    %v3458 = vpop.f32.mrf.mxu0
    %3459 = vdwg.mxu0
    %3460 = vmatpush.bf16.msra.mxu0 %v3083
    %3461 = vmatpush.bf16.msra.mxu0 %v3080
    %3462 = vmatpush.bf16.msra.mxu0 %v3077
    %3463 = vmatpush.bf16.msra.mxu0 %v3074
    %3464 = vmatpush.bf16.msra.mxu0 %v3071
    %3465 = vmatpush.bf16.msra.mxu0 %v3068
    %3466 = vmatpush.bf16.msra.mxu0 %v3065
    %3467 = vmatpush.bf16.msra.mxu0 %v3062
    %3468 = vmatmul.bf16.gmra.mxu0 %v2282
    %v3469 = vpop.f32.mrf.mxu0
    %v3470 = vadd.f32 %v3457, %v3469
    %v3471 = vpop.f32.mrf.mxu0
    %3472 = vdwg.mxu0
    %3473 = vmatpush.bf16.msra.mxu0 %v3107
    %3474 = vmatpush.bf16.msra.mxu0 %v3104
    %3475 = vmatpush.bf16.msra.mxu0 %v3101
    %3476 = vmatpush.bf16.msra.mxu0 %v3098
    %3477 = vmatpush.bf16.msra.mxu0 %v3095
    %3478 = vmatpush.bf16.msra.mxu0 %v3092
    %3479 = vmatpush.bf16.msra.mxu0 %v3089
    %3480 = vmatpush.bf16.msra.mxu0 %v3086
    %3481 = vmatmul.bf16.gmra.mxu0 %v2283
    %v3482 = vpop.f32.mrf.mxu0
    %v3483 = vadd.f32 %v3470, %v3482
    %v3484 = vpop.f32.mrf.mxu0
    %3485 = vdwg.mxu0
    %v3486 = vtanh.pop %v3327
    %v3487 = vtanh.pop %v3405
    %v3488 = vtanh.pop %v3483
    %v3489 = vpack.c.bf16 %v3486, %v3486
    %v3490 = vpack.c.bf16 %v3487, %v3487
    %v3491 = vpack.c.bf16 %v3488, %v3488
    %v3492 = vld [vmem:[%s5] sm:$0xf]
    %v3493 = vld [vmem:[%s5 + $0x4] sm:$0xf]
    %v3494 = vld [vmem:[%s5 + $0x8] sm:$0xf]
    %v3495 = vld [vmem:[%s5 + $0xc] sm:$0xf]
    %v3496 = vld [vmem:[%s5 + $0x10] sm:$0xf]
    %v3497 = vld [vmem:[%s5 + $0x14] sm:$0xf]
    %v3498 = vld [vmem:[%s5 + $0x18] sm:$0xf]
    %v3499 = vld [vmem:[%s5 + $0x1c] sm:$0xf]
    %v3500 = vld [vmem:[%s5 + $0x20] sm:$0xf]
    %v3501 = vld [vmem:[%s5 + $0x24] sm:$0xf]
    %v3502 = vld [vmem:[%s5 + $0x28] sm:$0xf]
    %v3503 = vld [vmem:[%s5 + $0x2c] sm:$0xf]
    %v3504 = vld [vmem:[%s5 + $0x30] sm:$0xf]
    %v3505 = vld [vmem:[%s5 + $0x34] sm:$0xf]
    %v3506 = vld [vmem:[%s5 + $0x38] sm:$0xf]
    %v3507 = vld [vmem:[%s5 + $0x3c] sm:$0xf]
    %v3508 = vld [vmem:[%s5 + $0x40] sm:$0xf]
    %v3509 = vld [vmem:[%s5 + $0x44] sm:$0xf]
    %v3510 = vld [vmem:[%s5 + $0x48] sm:$0xf]
    %v3511 = vld [vmem:[%s5 + $0x4c] sm:$0xf]
    %v3512 = vld [vmem:[%s5 + $0x50] sm:$0xf]
    %v3513 = vld [vmem:[%s5 + $0x54] sm:$0xf]
    %v3514 = vld [vmem:[%s5 + $0x58] sm:$0xf]
    %v3515 = vld [vmem:[%s5 + $0x5c] sm:$0xf]
    %v3516 = vld [vmem:[%s5 + $0x60] sm:$0xf]
    %v3517 = vld [vmem:[%s5 + $0x64] sm:$0xf]
    %v3518 = vld [vmem:[%s5 + $0x68] sm:$0xf]
    %v3519 = vld [vmem:[%s5 + $0x6c] sm:$0xf]
    %v3520 = vld [vmem:[%s5 + $0x70] sm:$0xf]
    %v3521 = vld [vmem:[%s5 + $0x74] sm:$0xf]
    %v3522 = vld [vmem:[%s5 + $0x78] sm:$0xf]
    %v3523 = vld [vmem:[%s5 + $0x7c] sm:$0xf]
    %v3524 = vld [vmem:[%s5 + $0x80] sm:$0xf]
    %v3525 = vld [vmem:[%s5 + $0x84] sm:$0xf]
    %v3526 = vld [vmem:[%s5 + $0x88] sm:$0xf]
    %v3527 = vld [vmem:[%s5 + $0x8c] sm:$0xf]
    %v3528 = vld [vmem:[%s5 + $0x90] sm:$0xf]
    %v3529 = vld [vmem:[%s5 + $0x94] sm:$0xf]
    %v3530 = vld [vmem:[%s5 + $0x98] sm:$0xf]
    %v3531 = vld [vmem:[%s5 + $0x9c] sm:$0xf]
    %v3532 = vld [vmem:[%s5 + $0xa0] sm:$0xf]
    %v3533 = vld [vmem:[%s5 + $0xa4] sm:$0xf]
    %v3534 = vld [vmem:[%s5 + $0xa8] sm:$0xf]
    %v3535 = vld [vmem:[%s5 + $0xac] sm:$0xf]
    %v3536 = vld [vmem:[%s5 + $0xb0] sm:$0xf]
    %v3537 = vld [vmem:[%s5 + $0xb4] sm:$0xf]
    %v3538 = vld [vmem:[%s5 + $0xb8] sm:$0xf]
    %v3539 = vld [vmem:[%s5 + $0xbc] sm:$0xf]
    %v3540 = vld [vmem:[%s6] sm:$0x1]
    %v3542 = vperm.slane %v3540, 0
    %v3592 = vunpack.c.l.b16 %v3492
    %v3593 = vunpack.c.l.b16 %v3493
    %v3594 = vunpack.c.l.b16 %v3494
    %v3595 = vunpack.c.l.b16 %v3495
    %v3596 = vunpack.c.l.b16 %v3496
    %v3597 = vunpack.c.l.b16 %v3497
    %v3598 = vunpack.c.l.b16 %v3498
    %v3599 = vunpack.c.l.b16 %v3499
    %v3600 = vunpack.c.l.b16 %v3500
    %v3601 = vunpack.c.l.b16 %v3501
    %v3602 = vunpack.c.l.b16 %v3502
    %v3603 = vunpack.c.l.b16 %v3503
    %v3604 = vunpack.c.l.b16 %v3504
    %v3605 = vunpack.c.l.b16 %v3505
    %v3606 = vunpack.c.l.b16 %v3506
    %v3607 = vunpack.c.l.b16 %v3507
    %v3608 = vunpack.c.l.b16 %v3508
    %v3609 = vunpack.c.l.b16 %v3509
    %v3610 = vunpack.c.l.b16 %v3510
    %v3611 = vunpack.c.l.b16 %v3511
    %v3612 = vunpack.c.l.b16 %v3512
    %v3613 = vunpack.c.l.b16 %v3513
    %v3614 = vunpack.c.l.b16 %v3514
    %v3615 = vunpack.c.l.b16 %v3515
    %v3616 = vunpack.c.l.b16 %v3516
    %v3617 = vunpack.c.l.b16 %v3517
    %v3618 = vunpack.c.l.b16 %v3518
    %v3619 = vunpack.c.l.b16 %v3519
    %v3620 = vunpack.c.l.b16 %v3520
    %v3621 = vunpack.c.l.b16 %v3521
    %v3622 = vunpack.c.l.b16 %v3522
    %v3623 = vunpack.c.l.b16 %v3523
    %v3624 = vunpack.c.l.b16 %v3524
    %v3625 = vunpack.c.l.b16 %v3525
    %v3626 = vunpack.c.l.b16 %v3526
    %v3627 = vunpack.c.l.b16 %v3527
    %v3628 = vunpack.c.l.b16 %v3528
    %v3629 = vunpack.c.l.b16 %v3529
    %v3630 = vunpack.c.l.b16 %v3530
    %v3631 = vunpack.c.l.b16 %v3531
    %v3632 = vunpack.c.l.b16 %v3532
    %v3633 = vunpack.c.l.b16 %v3533
    %v3634 = vunpack.c.l.b16 %v3534
    %v3635 = vunpack.c.l.b16 %v3535
    %v3636 = vunpack.c.l.b16 %v3536
    %v3637 = vunpack.c.l.b16 %v3537
    %v3638 = vunpack.c.l.b16 %v3538
    %v3639 = vunpack.c.l.b16 %v3539
    %v3640 = vpack.c.b16 %v3593, %v3592
    %v3641 = vpack.c.b16 %v3595, %v3594
    %v3642 = vpack.c.b16 %v3597, %v3596
    %v3643 = vpack.c.b16 %v3599, %v3598
    %v3644 = vpack.c.b16 %v3601, %v3600
    %v3645 = vpack.c.b16 %v3603, %v3602
    %v3646 = vpack.c.b16 %v3605, %v3604
    %v3647 = vpack.c.b16 %v3607, %v3606
    %v3648 = vpack.c.b16 %v3609, %v3608
    %v3649 = vpack.c.b16 %v3611, %v3610
    %v3650 = vpack.c.b16 %v3613, %v3612
    %v3651 = vpack.c.b16 %v3615, %v3614
    %v3652 = vpack.c.b16 %v3617, %v3616
    %v3653 = vpack.c.b16 %v3619, %v3618
    %v3654 = vpack.c.b16 %v3621, %v3620
    %v3655 = vpack.c.b16 %v3623, %v3622
    %v3656 = vpack.c.b16 %v3625, %v3624
    %v3657 = vpack.c.b16 %v3627, %v3626
    %v3658 = vpack.c.b16 %v3629, %v3628
    %v3659 = vpack.c.b16 %v3631, %v3630
    %v3660 = vpack.c.b16 %v3633, %v3632
    %v3661 = vpack.c.b16 %v3635, %v3634
    %v3662 = vpack.c.b16 %v3637, %v3636
    %v3663 = vpack.c.b16 %v3639, %v3638
    %3688 = vmatpush.bf16.msra.mxu0 %v3647
    %3689 = vmatpush.bf16.msra.mxu0 %v3646
    %3690 = vmatpush.bf16.msra.mxu0 %v3645
    %3691 = vmatpush.bf16.msra.mxu0 %v3644
    %3692 = vmatpush.bf16.msra.mxu0 %v3643
    %3693 = vmatpush.bf16.msra.mxu0 %v3642
    %3694 = vmatpush.bf16.msra.mxu0 %v3641
    %3695 = vmatpush.bf16.msra.mxu0 %v3640
    %3696 = vmatmul.bf16.gmra.mxu0 %v3489
    %v3697 = vpop.f32.mrf.mxu0
    %v3698 = vadd.f32 %v3542, %v3697
    %v3699 = vpop.f32.mrf.mxu0
    %3700 = vdwg.mxu0
    %3701 = vmatpush.bf16.msra.mxu0 %v3655
    %3702 = vmatpush.bf16.msra.mxu0 %v3654
    %3703 = vmatpush.bf16.msra.mxu0 %v3653
    %3704 = vmatpush.bf16.msra.mxu0 %v3652
    %3705 = vmatpush.bf16.msra.mxu0 %v3651
    %3706 = vmatpush.bf16.msra.mxu0 %v3650
    %3707 = vmatpush.bf16.msra.mxu0 %v3649
    %3708 = vmatpush.bf16.msra.mxu0 %v3648
    %3709 = vmatmul.bf16.gmra.mxu0 %v3490
    %v3710 = vpop.f32.mrf.mxu0
    %v3711 = vadd.f32 %v3698, %v3710
    %v3712 = vpop.f32.mrf.mxu0
    %3713 = vdwg.mxu0
    %3714 = vmatpush.bf16.msra.mxu0 %v3663
    %3715 = vmatpush.bf16.msra.mxu0 %v3662
    %3716 = vmatpush.bf16.msra.mxu0 %v3661
    %3717 = vmatpush.bf16.msra.mxu0 %v3660
    %3718 = vmatpush.bf16.msra.mxu0 %v3659
    %3719 = vmatpush.bf16.msra.mxu0 %v3658
    %3720 = vmatpush.bf16.msra.mxu0 %v3657
    %3721 = vmatpush.bf16.msra.mxu0 %v3656
    %3722 = vmatmul.bf16.gmra.mxu0 %v3491
    %v3723 = vpop.f32.mrf.mxu0
    %v3724 = vadd.f32 %v3711, %v3723
    %v3725 = vpop.f32.mrf.mxu0
    %3726 = vdwg.mxu0
    %v3727 = vtanh.pop %v3724
    %v3728 = vld [vmem:[%s7] sm:$0xff]
    %v3729 = vld [vmem:[%s7 + $0x8] sm:$0xff]
    %v3730 = vld [vmem:[%s7 + $0x10] sm:$0xff]
    %v3731 = vld [vmem:[%s7 + $0x18] sm:$0xff]
    %v3732 = vld [vmem:[%s7 + $0x20] sm:$0xff]
    %v3733 = vld [vmem:[%s7 + $0x28] sm:$0xff]
    %v3734 = vld [vmem:[%s7 + $0x30] sm:$0xff]
    %v3735 = vld [vmem:[%s7 + $0x38] sm:$0xff]
    %v3736 = vld [vmem:[%s7 + $0x40] sm:$0xff]
    %v3737 = vld [vmem:[%s7 + $0x48] sm:$0xff]
    %v3738 = vld [vmem:[%s7 + $0x50] sm:$0xff]
    %v3739 = vld [vmem:[%s7 + $0x58] sm:$0xff]
    %v3740 = vld [vmem:[%s7 + $0x60] sm:$0xff]
    %v3741 = vld [vmem:[%s7 + $0x68] sm:$0xff]
    %v3742 = vld [vmem:[%s7 + $0x70] sm:$0xff]
    %v3743 = vld [vmem:[%s7 + $0x78] sm:$0xff]
    %v3744 = vld [vmem:[%s8] sm:$0x1]
    %v3746 = vperm.slane %v3744, 0
    %3748 = vmatpush.msra.mxu0 %v3743
    %3749 = vmatpush.msra.mxu0 %v3742
    %3750 = vmatpush.msra.mxu0 %v3741
    %3751 = vmatpush.msra.mxu0 %v3740
    %3752 = vmatpush.msra.mxu0 %v3739
    %3753 = vmatpush.msra.mxu0 %v3738
    %3754 = vmatpush.msra.mxu0 %v3737
    %3755 = vmatpush.msra.mxu0 %v3736
    %3756 = vmatpush.msra.mxu0 %v3735
    %3757 = vmatpush.msra.mxu0 %v3734
    %3758 = vmatpush.msra.mxu0 %v3733
    %3759 = vmatpush.msra.mxu0 %v3732
    %3760 = vmatpush.msra.mxu0 %v3731
    %3761 = vmatpush.msra.mxu0 %v3730
    %3762 = vmatpush.msra.mxu0 %v3729
    %3763 = vmatpush.msra.mxu0 %v3728
    %3764 = vmatmul.f32.gmra.mxu0 %v3727
    %v3765 = vpop.f32.mrf.mxu0
    %v3766 = vadd.f32 %v3746, %v3765
    %3767 = vdwg.mxu0
    %vm3768 = vcmask 15360
    %3769 = vst.msk [vmem:[%s10] sm:$0xff] %vm3768, %v3766
    %v3770 = vsel %vm3768, %v3766, -inf
    %3771 = vmax.xlane.f32.xlu0 %v3770
    %v3772 = vpop.xlane.xlu0 %3771
    %v3773 = vsub.f32 %v3766, %v3772
    %v3774 = vmul.f32 %v3773, 1.442695
    %v3775 = vpow.pop %v3774
    %v3776 = vsel %vm3768, %v3775, 0.0
    %3777 = vadd.xlane.f32.xlu0 %v3776
    %v3778 = vpop.xlane.xlu0 %3777
    %v3779 = vlog2.pop %v3778
    %v3780 = vmul.f32 %v3779, 0.6931472
    %v3781 = vadd.f32 %v3772, %v3780
    %v3782 = vlaneseq
    %v3783 = vand.u32 %v3782, 127
    %v3784 = vld [vmem:[%s9] sm:$0xff]
    %3785 = vset.pattern.permute.xlu0 0
    %3786 = vperm.xlu0 %3785, %v3784
    %v3787 = vpop.permute.xlu0 %3786
    %vm3788 = vcmp.eq.s32.totalorder %v3783, %v3787
    %v3789 = vsel %vm3788, 1, 0
    %v3790 = vcvt.s32.f32 %v3789
    %v3791 = vmul.f32 %v3766, %v3790
    %v3792 = vsel %vm3768, %v3791, 0.0
    %3793 = vadd.xlane.f32.xlu0 %v3792
    %v3794 = vpop.xlane.xlu0 %3793
    %v3795 = vsub.f32 %v3781, %v3794
    %vm3796 = vcmask 7168
    %v3797 = vsel %vm3796, %v3795, 0.0
    %3798 = vadd.xlane.f32.xlu0 %v3797
    %v3799 = vpop.xlane.xlu0 %3798
    %v3800 = vrot.slane %v3799, 4
    %v3801 = vadd.f32 %v3799, %v3800
    %v3802 = vrot.slane %v3801, 2
    %v3803 = vadd.f32 %v3801, %v3802
    %v3804 = vrot.slane %v3803, 1
    %v3805 = vadd.f32 %v3803, %v3804
    %s3806 = vtos %v3805
    %s3807 = smul.f32 %s3806, 0.125
    %s3808 = scalar_lea.smem [#allocation2], 0
    %3809 = sst [smem:[%s3808]] %s3807
    // Predicated region
    $region42: #{forward.1} parent=1 // pred_check
      _
    $region43: #{forward.1} parent=1 // pred_check_branch
      %3811 = sbr.rel (0) target = $region45
    $region44: #{forward.1} parent=1 // pred_region
      _
    $region45: #{forward.1} parent=1 // pred_fallthru
      _
    // Predicated region
    $region46: #{forward.1} parent=1 // pred_check
      _
    $region47: #{forward.1} parent=1 // pred_check_branch
      %3813 = sbr.rel (0) target = $region49
    $region48: #{forward.1} parent=1 // pred_region
      %3815 = vsyncadd [#allocation3], 0
      %s3817 = sshll.u32 %s11, 4
      %s3818 = int_to_ptr.hbm [resolvable:$true] %s3817
      %3820 = dma.smem_to_hbm [#allocation2], 16, %s3818, [#allocation3]
    $region49: #{forward.1} parent=1 // pred_fallthru
      _
    // Predicated region
    $region50: #{forward.1} parent=1 // pred_check
      _
    $region51: #{forward.1} parent=1 // pred_check_branch
      %3822 = sbr.rel (0) target = $region53
    $region52: #{forward.1} parent=1 // pred_region
      _
    $region53: #{forward.1} parent=1 // pred_fallthru
      _
    // Predicated region
    $region54: #{forward.1} parent=1 // pred_check
      _
    $region55: #{forward.1} parent=1 // pred_check_branch
      %3824 = sbr.rel (0) target = $region57
    $region56: #{forward.1} parent=1 // pred_region
      %3826 = dma.done [#allocation3], 16
    $region57: #{forward.1} parent=1 // pred_fallthru
      _
    %3827 = sfence
    %3828 = vsyncpa [#allocation3], 1

</llo_original>
